<compile_context>
chip_gen: v6e
topology: v6e:2x2x1
jax: 0.10.0
libtpu: 0.0.40
codegen_flags: <defaults>
</compile_context>

<pallas_src>
import jax
import jax.numpy as jnp
from jax.experimental import pallas as pl
from jax.experimental.pallas import tpu as pltpu


def _make_rae_kernel(relu_flags):
    """Build a fused MLP kernel for a fixed layer structure (transposed layout).

    relu_flags[l] == True  -> apply ReLU after layer l.
    Kernel signature: (x_ref, w0, b0, w1, b1, ..., out_ref)
      x_ref:  [D, tile_b]      (batch on the lane axis)
      w_l:    [d_out, d_in]    (PyTorch nn.Linear layout)
      b_l:    [d_out, 1]
      out:    [D, tile_b]
    """
    n_layers = len(relu_flags)

    def kernel(x_ref, *refs):
        out_ref = refs[-1]
        param_refs = refs[:-1]
        assert len(param_refs) == 2 * n_layers

        x = x_ref[...]                       # keep residual in its loaded dtype
        h = x
        for l in range(n_layers):
            w = param_refs[2 * l][...]       # [d_out, d_in]
            b = param_refs[2 * l + 1][...]   # [d_out, 1]  (broadcasts over lanes)
            if h.dtype != w.dtype:           # no-op for f32 params
                h = h.astype(w.dtype)
            # MXU matmul with f32 accumulation; output [d_out, tile_b] is
            # lane-dense because tile_b is a multiple of 128.
            h = jnp.dot(w, h, preferred_element_type=jnp.float32)
            if relu_flags[l]:
                h = jnp.maximum(h + b, 0.0)  # fused bias + ReLU on the VPU
            else:
                h = h + b
        # residual connection: decoder(encoder(x)) + x
        out_ref[...] = (h + x).astype(out_ref.dtype)

    return kernel


def rae_forward(x, weights, biases, relu_flags, *, tile_b=256,
                single_buffer_params=True):
    """Run the fused RAE forward pass.

    x:        [B, input_dim]
    weights:  list of [d_out, d_in] arrays (encoder layers then decoder layers)
    biases:   list of [d_out, 1] arrays
    relu_flags: list of bool, one per layer
    tile_b:   batch tile size (multiple of 128; batch is padded if needed)
    """
    B, D = x.shape
    grid_b = pl.cdiv(B, tile_b)
    B_pad = grid_b * tile_b

    # Layout plumbing: put the batch dim on the 128-lane axis.
    x_t = x.T                                            # [D, B]
    if B_pad != B:
        x_t = jnp.pad(x_t, ((0, 0), (0, B_pad - B)))     # pad batch tail

    kernel = _make_rae_kernel(tuple(relu_flags))

    def make_param_spec(shape):
        # Constant index across the grid -> single-buffering is enough.
        if single_buffer_params:
            return pl.BlockSpec(shape, lambda i: (0, 0),
                                pipeline_mode=pl.Buffered(1))
        return pl.BlockSpec(shape, lambda i: (0, 0))

    in_specs = [pl.BlockSpec((D, tile_b), lambda i: (0, i))]
    args = [x_t]
    for w, b in zip(weights, biases):
        in_specs.append(make_param_spec(w.shape))
        in_specs.append(make_param_spec(b.shape))
        args.append(w)
        args.append(b)

    out_spec = pl.BlockSpec((D, tile_b), lambda i: (0, i))

    fn = pl.pallas_call(
        kernel,
        out_shape=jax.ShapeDtypeStruct((D, B_pad), x.dtype),
        grid_spec=pltpu.PrefetchScalarGridSpec(
            num_scalar_prefetch=0,
            grid=(grid_b,),
            in_specs=in_specs,
            out_specs=out_spec,
        ),
        compiler_params=pltpu.CompilerParams(
            dimension_semantics=("parallel",),   # batch tiles shard across TCs
        ),
    )
    out_t = fn(*args)              # [D, B_pad]
    return out_t[:, :B].T          # back to [B, D]


def init_rae_params(key, input_dim, hidden_params):
    """Deterministically initialize encoder+decoder Linear params.

    Mirrors the PyTorch module structure:
      dims = (input_dim,) + hidden_params  -> encoder layers over consecutive pairs
      reversed(dims)                        -> decoder layers over consecutive pairs
    Init is uniform(-1/sqrt(d_in), 1/sqrt(d_in)) like nn.Linear's default.
    Returns (weights [d_out, d_in], biases [d_out, 1], relu_flags).
    """
    enc_dims = (input_dim,) + tuple(hidden_params)
    dec_dims = tuple(reversed(enc_dims))

    layer_dims = []
    relu_flags = []
    # encoder
    for idx, (p1, p2) in enumerate(zip(enc_dims[:-1], enc_dims[1:])):
        layer_dims.append((p1, p2))
        relu_flags.append(idx < len(enc_dims) - 2)
    # decoder
    for idx, (p1, p2) in enumerate(zip(dec_dims[:-1], dec_dims[1:])):
        layer_dims.append((p1, p2))
        relu_flags.append(idx < len(dec_dims) - 2)

    weights, biases = [], []
    for (d_in, d_out) in layer_dims:
        key, kw, kb = jax.random.split(key, 3)
        bound = 1.0 / jnp.sqrt(jnp.float32(d_in))
        w = jax.random.uniform(kw, (d_out, d_in), jnp.float32, -bound, bound)
        b = jax.random.uniform(kb, (d_out, 1), jnp.float32, -bound, bound)
        weights.append(w)
        biases.append(b)
    return weights, biases, relu_flags


def rae_reference(x, weights, biases, relu_flags):
    """Pure-JAX reference for correctness checking (standard [B, D] layout)."""
    h = x.astype(jnp.float32)
    for w, b, r in zip(weights, biases, relu_flags):
        h = h @ w.T + b[:, 0]
        if r:
            h = jnp.maximum(h, 0.0)
    return (h + x).astype(x.dtype)


if __name__ == "__main__":
    # Shapes consistent with the module (flat feature vectors), but with a
    # batch large enough to give lane-dense tiles and >=2 parallel grid steps.
    input_dim = 32
    hidden_params = (16, 8)   # encoder: 32->16->8, decoder: 8->16->32
    batch = 512
    tile_b = 256              # grid = 2 parallel steps (uses both v7x TCs)

    key = jax.random.PRNGKey(0)
    key, kx = jax.random.split(key)
    x = jax.random.normal(kx, (batch, input_dim), jnp.float32)

    weights, biases, relu_flags = init_rae_params(key, input_dim, hidden_params)

    try:
        out = rae_forward(x, weights, biases, relu_flags, tile_b=tile_b,
                          single_buffer_params=True)
        out = jax.block_until_ready(out)
    except Exception:
        # Fallback if this Pallas build rejects pl.Buffered(1) for inputs.
        out = rae_forward(x, weights, biases, relu_flags, tile_b=tile_b,
                          single_buffer_params=False)
        out = jax.block_until_ready(out)

    ref = rae_reference(x, weights, biases, relu_flags)
    assert out.shape == x.shape and out.dtype == x.dtype
    assert jnp.allclose(out, ref, atol=1e-4, rtol=1e-4), "mismatch vs reference"

    print("KERNEL_OK")
</pallas_src>

<mosaic_0001>
module attributes {stable_mosaic.version = 11 : i64} {
  func.func @kernel(%arg0: i32, %arg1: memref<32x256xf32, #tpu.memory_space<vmem>>, %arg2: memref<16x32xf32, #tpu.memory_space<vmem>>, %arg3: memref<16x1xf32, #tpu.memory_space<vmem>>, %arg4: memref<8x16xf32, #tpu.memory_space<vmem>>, %arg5: memref<8x1xf32, #tpu.memory_space<vmem>>, %arg6: memref<16x8xf32, #tpu.memory_space<vmem>>, %arg7: memref<16x1xf32, #tpu.memory_space<vmem>>, %arg8: memref<32x16xf32, #tpu.memory_space<vmem>>, %arg9: memref<32x1xf32, #tpu.memory_space<vmem>>, %arg10: memref<32x256xf32, #tpu.memory_space<vmem>>) attributes {dimension_semantics = [#tpu.dimension_semantics<parallel>], iteration_bounds = array<i64: 2>, scalar_prefetch = 0 : i64, scratch_operands = 0 : i64, tpu.core_type = #tpu.core_type<tc>, window_params = [{transform_indices = @transform_0, window_bounds = array<i64: 32, 256>}, {pipeline_mode = #tpu.pipeline_mode<synchronous>, transform_indices = @transform_1, window_bounds = array<i64: 16, 32>}, {pipeline_mode = #tpu.pipeline_mode<synchronous>, transform_indices = @transform_2, window_bounds = array<i64: 16, 1>}, {pipeline_mode = #tpu.pipeline_mode<synchronous>, transform_indices = @transform_3, window_bounds = array<i64: 8, 16>}, {pipeline_mode = #tpu.pipeline_mode<synchronous>, transform_indices = @transform_4, window_bounds = array<i64: 8, 1>}, {pipeline_mode = #tpu.pipeline_mode<synchronous>, transform_indices = @transform_5, window_bounds = array<i64: 16, 8>}, {pipeline_mode = #tpu.pipeline_mode<synchronous>, transform_indices = @transform_6, window_bounds = array<i64: 16, 1>}, {pipeline_mode = #tpu.pipeline_mode<synchronous>, transform_indices = @transform_7, window_bounds = array<i64: 32, 16>}, {pipeline_mode = #tpu.pipeline_mode<synchronous>, transform_indices = @transform_8, window_bounds = array<i64: 32, 1>}, {transform_indices = @transform_9, window_bounds = array<i64: 32, 256>}]} {
    %c0 = arith.constant 0 : index
    %c0_0 = arith.constant 0 : index
    %0 = vector.load %arg1[%c0, %c0_0] : memref<32x256xf32, #tpu.memory_space<vmem>>, vector<32x256xf32>
    %c0_1 = arith.constant 0 : index
    %c0_2 = arith.constant 0 : index
    %1 = vector.load %arg2[%c0_1, %c0_2] : memref<16x32xf32, #tpu.memory_space<vmem>>, vector<16x32xf32>
    %c0_3 = arith.constant 0 : index
    %c0_4 = arith.constant 0 : index
    %2 = vector.load %arg3[%c0_3, %c0_4] : memref<16x1xf32, #tpu.memory_space<vmem>>, vector<16x1xf32>
    %cst = arith.constant dense<0.000000e+00> : vector<16x256xf32>
    %3 = tpu.matmul %1, %0, %cst {dimension_numbers = #tpu.dot_dimension_numbers<[1], [0], [0], [1], [0, 0, 1, 1], [], []>} : vector<16x32xf32>, vector<32x256xf32>, vector<16x256xf32> -> vector<16x256xf32>
    %4 = vector.broadcast %2 : vector<16x1xf32> to vector<16x256xf32>
    %5 = arith.addf %3, %4 : vector<16x256xf32>
    %cst_5 = arith.constant 0.000000e+00 : f32
    %6 = vector.broadcast %cst_5 : f32 to vector<16x256xf32>
    %7 = arith.maximumf %5, %6 : vector<16x256xf32>
    %c0_6 = arith.constant 0 : index
    %c0_7 = arith.constant 0 : index
    %8 = vector.load %arg4[%c0_6, %c0_7] : memref<8x16xf32, #tpu.memory_space<vmem>>, vector<8x16xf32>
    %c0_8 = arith.constant 0 : index
    %c0_9 = arith.constant 0 : index
    %9 = vector.load %arg5[%c0_8, %c0_9] : memref<8x1xf32, #tpu.memory_space<vmem>>, vector<8x1xf32>
    %cst_10 = arith.constant dense<0.000000e+00> : vector<8x256xf32>
    %10 = tpu.matmul %8, %7, %cst_10 {dimension_numbers = #tpu.dot_dimension_numbers<[1], [0], [0], [1], [0, 0, 1, 1], [], []>} : vector<8x16xf32>, vector<16x256xf32>, vector<8x256xf32> -> vector<8x256xf32>
    %11 = vector.broadcast %9 : vector<8x1xf32> to vector<8x256xf32>
    %12 = arith.addf %10, %11 : vector<8x256xf32>
    %c0_11 = arith.constant 0 : index
    %c0_12 = arith.constant 0 : index
    %13 = vector.load %arg6[%c0_11, %c0_12] : memref<16x8xf32, #tpu.memory_space<vmem>>, vector<16x8xf32>
    %c0_13 = arith.constant 0 : index
    %c0_14 = arith.constant 0 : index
    %14 = vector.load %arg7[%c0_13, %c0_14] : memref<16x1xf32, #tpu.memory_space<vmem>>, vector<16x1xf32>
    %cst_15 = arith.constant dense<0.000000e+00> : vector<16x256xf32>
    %15 = tpu.matmul %13, %12, %cst_15 {dimension_numbers = #tpu.dot_dimension_numbers<[1], [0], [0], [1], [0, 0, 1, 1], [], []>} : vector<16x8xf32>, vector<8x256xf32>, vector<16x256xf32> -> vector<16x256xf32>
    %16 = vector.broadcast %14 : vector<16x1xf32> to vector<16x256xf32>
    %17 = arith.addf %15, %16 : vector<16x256xf32>
    %cst_16 = arith.constant 0.000000e+00 : f32
    %18 = vector.broadcast %cst_16 : f32 to vector<16x256xf32>
    %19 = arith.maximumf %17, %18 : vector<16x256xf32>
    %c0_17 = arith.constant 0 : index
    %c0_18 = arith.constant 0 : index
    %20 = vector.load %arg8[%c0_17, %c0_18] : memref<32x16xf32, #tpu.memory_space<vmem>>, vector<32x16xf32>
    %c0_19 = arith.constant 0 : index
    %c0_20 = arith.constant 0 : index
    %21 = vector.load %arg9[%c0_19, %c0_20] : memref<32x1xf32, #tpu.memory_space<vmem>>, vector<32x1xf32>
    %cst_21 = arith.constant dense<0.000000e+00> : vector<32x256xf32>
    %22 = tpu.matmul %20, %19, %cst_21 {dimension_numbers = #tpu.dot_dimension_numbers<[1], [0], [0], [1], [0, 0, 1, 1], [], []>} : vector<32x16xf32>, vector<16x256xf32>, vector<32x256xf32> -> vector<32x256xf32>
    %23 = vector.broadcast %21 : vector<32x1xf32> to vector<32x256xf32>
    %24 = arith.addf %22, %23 : vector<32x256xf32>
    %25 = arith.addf %24, %0 : vector<32x256xf32>
    %c0_22 = arith.constant 0 : index
    %c0_23 = arith.constant 0 : index
    %26 = vector.load %arg10[%c0_22, %c0_23] : memref<32x256xf32, #tpu.memory_space<vmem>>, vector<32x256xf32>
    tpu.vector_store %arg10[%c0_22, %c0_23], %25 {strides = array<i32>} : memref<32x256xf32, #tpu.memory_space<vmem>>, vector<32x256xf32>,
    return
  }
  func.func @transform_0(%arg0: i32) -> (i32, i32) {
    %c0_i32 = arith.constant 0 : i32
    %c0_i32_0 = arith.constant 0 : i32
    return %c0_i32, %arg0 : i32, i32
  }
  func.func @transform_1(%arg0: i32) -> (i32, i32) {
    %c0_i32 = arith.constant 0 : i32
    %c0_i32_0 = arith.constant 0 : i32
    %c0_i32_1 = arith.constant 0 : i32
    return %c0_i32, %c0_i32_0 : i32, i32
  }
  func.func @transform_2(%arg0: i32) -> (i32, i32) {
    %c0_i32 = arith.constant 0 : i32
    %c0_i32_0 = arith.constant 0 : i32
    %c0_i32_1 = arith.constant 0 : i32
    return %c0_i32, %c0_i32_0 : i32, i32
  }
  func.func @transform_3(%arg0: i32) -> (i32, i32) {
    %c0_i32 = arith.constant 0 : i32
    %c0_i32_0 = arith.constant 0 : i32
    %c0_i32_1 = arith.constant 0 : i32
    return %c0_i32, %c0_i32_0 : i32, i32
  }
  func.func @transform_4(%arg0: i32) -> (i32, i32) {
    %c0_i32 = arith.constant 0 : i32
    %c0_i32_0 = arith.constant 0 : i32
    %c0_i32_1 = arith.constant 0 : i32
    return %c0_i32, %c0_i32_0 : i32, i32
  }
  func.func @transform_5(%arg0: i32) -> (i32, i32) {
    %c0_i32 = arith.constant 0 : i32
    %c0_i32_0 = arith.constant 0 : i32
    %c0_i32_1 = arith.constant 0 : i32
    return %c0_i32, %c0_i32_0 : i32, i32
  }
  func.func @transform_6(%arg0: i32) -> (i32, i32) {
    %c0_i32 = arith.constant 0 : i32
    %c0_i32_0 = arith.constant 0 : i32
    %c0_i32_1 = arith.constant 0 : i32
    return %c0_i32, %c0_i32_0 : i32, i32
  }
  func.func @transform_7(%arg0: i32) -> (i32, i32) {
    %c0_i32 = arith.constant 0 : i32
    %c0_i32_0 = arith.constant 0 : i32
    %c0_i32_1 = arith.constant 0 : i32
    return %c0_i32, %c0_i32_0 : i32, i32
  }
  func.func @transform_8(%arg0: i32) -> (i32, i32) {
    %c0_i32 = arith.constant 0 : i32
    %c0_i32_0 = arith.constant 0 : i32
    %c0_i32_1 = arith.constant 0 : i32
    return %c0_i32, %c0_i32_0 : i32, i32
  }
  func.func @transform_9(%arg0: i32) -> (i32, i32) {
    %c0_i32 = arith.constant 0 : i32
    %c0_i32_0 = arith.constant 0 : i32
    return %c0_i32, %arg0 : i32, i32
  }
}

module attributes {stable_mosaic.version = 11 : i64} {
  func.func @kernel(%arg0: i32, %arg1: memref<32x256xf32, #tpu.memory_space<vmem>>, %arg2: memref<16x32xf32, #tpu.memory_space<vmem>>, %arg3: memref<16x1xf32, #tpu.memory_space<vmem>>, %arg4: memref<8x16xf32, #tpu.memory_space<vmem>>, %arg5: memref<8x1xf32, #tpu.memory_space<vmem>>, %arg6: memref<16x8xf32, #tpu.memory_space<vmem>>, %arg7: memref<16x1xf32, #tpu.memory_space<vmem>>, %arg8: memref<32x16xf32, #tpu.memory_space<vmem>>, %arg9: memref<32x1xf32, #tpu.memory_space<vmem>>, %arg10: memref<32x256xf32, #tpu.memory_space<vmem>>) attributes {dimension_semantics = [#tpu.dimension_semantics<parallel>], iteration_bounds = array<i64: 2>, scalar_prefetch = 0 : i64, scratch_operands = 0 : i64, tpu.core_type = #tpu.core_type<tc>, window_params = [{transform_indices = @transform_0, window_bounds = array<i64: 32, 256>}, {pipeline_mode = #tpu.pipeline_mode<synchronous>, transform_indices = @transform_1, window_bounds = array<i64: 16, 32>}, {pipeline_mode = #tpu.pipeline_mode<synchronous>, transform_indices = @transform_2, window_bounds = array<i64: 16, 1>}, {pipeline_mode = #tpu.pipeline_mode<synchronous>, transform_indices = @transform_3, window_bounds = array<i64: 8, 16>}, {pipeline_mode = #tpu.pipeline_mode<synchronous>, transform_indices = @transform_4, window_bounds = array<i64: 8, 1>}, {pipeline_mode = #tpu.pipeline_mode<synchronous>, transform_indices = @transform_5, window_bounds = array<i64: 16, 8>}, {pipeline_mode = #tpu.pipeline_mode<synchronous>, transform_indices = @transform_6, window_bounds = array<i64: 16, 1>}, {pipeline_mode = #tpu.pipeline_mode<synchronous>, transform_indices = @transform_7, window_bounds = array<i64: 32, 16>}, {pipeline_mode = #tpu.pipeline_mode<synchronous>, transform_indices = @transform_8, window_bounds = array<i64: 32, 1>}, {transform_indices = @transform_9, window_bounds = array<i64: 32, 256>}]} {
    %c0 = arith.constant 0 : index
    %c0_0 = arith.constant 0 : index
    %0 = vector.load %arg1[%c0, %c0_0] : memref<32x256xf32, #tpu.memory_space<vmem>>, vector<32x256xf32>
    %c0_1 = arith.constant 0 : index
    %c0_2 = arith.constant 0 : index
    %1 = vector.load %arg2[%c0_1, %c0_2] : memref<16x32xf32, #tpu.memory_space<vmem>>, vector<16x32xf32>
    %c0_3 = arith.constant 0 : index
    %c0_4 = arith.constant 0 : index
    %2 = vector.load %arg3[%c0_3, %c0_4] : memref<16x1xf32, #tpu.memory_space<vmem>>, vector<16x1xf32>
    %cst = arith.constant dense<0.000000e+00> : vector<16x256xf32>
    %3 = tpu.matmul %1, %0, %cst {dimension_numbers = #tpu.dot_dimension_numbers<[1], [0], [0], [1], [0, 0, 1, 1], [], []>} : vector<16x32xf32>, vector<32x256xf32>, vector<16x256xf32> -> vector<16x256xf32>
    %4 = vector.broadcast %2 : vector<16x1xf32> to vector<16x256xf32>
    %5 = arith.addf %3, %4 : vector<16x256xf32>
    %cst_5 = arith.constant 0.000000e+00 : f32
    %6 = vector.broadcast %cst_5 : f32 to vector<16x256xf32>
    %7 = arith.maximumf %5, %6 : vector<16x256xf32>
    %c0_6 = arith.constant 0 : index
    %c0_7 = arith.constant 0 : index
    %8 = vector.load %arg4[%c0_6, %c0_7] : memref<8x16xf32, #tpu.memory_space<vmem>>, vector<8x16xf32>
    %c0_8 = arith.constant 0 : index
    %c0_9 = arith.constant 0 : index
    %9 = vector.load %arg5[%c0_8, %c0_9] : memref<8x1xf32, #tpu.memory_space<vmem>>, vector<8x1xf32>
    %cst_10 = arith.constant dense<0.000000e+00> : vector<8x256xf32>
    %10 = tpu.matmul %8, %7, %cst_10 {dimension_numbers = #tpu.dot_dimension_numbers<[1], [0], [0], [1], [0, 0, 1, 1], [], []>} : vector<8x16xf32>, vector<16x256xf32>, vector<8x256xf32> -> vector<8x256xf32>
    %11 = vector.broadcast %9 : vector<8x1xf32> to vector<8x256xf32>
    %12 = arith.addf %10, %11 : vector<8x256xf32>
    %c0_11 = arith.constant 0 : index
    %c0_12 = arith.constant 0 : index
    %13 = vector.load %arg6[%c0_11, %c0_12] : memref<16x8xf32, #tpu.memory_space<vmem>>, vector<16x8xf32>
    %c0_13 = arith.constant 0 : index
    %c0_14 = arith.constant 0 : index
    %14 = vector.load %arg7[%c0_13, %c0_14] : memref<16x1xf32, #tpu.memory_space<vmem>>, vector<16x1xf32>
    %cst_15 = arith.constant dense<0.000000e+00> : vector<16x256xf32>
    %15 = tpu.matmul %13, %12, %cst_15 {dimension_numbers = #tpu.dot_dimension_numbers<[1], [0], [0], [1], [0, 0, 1, 1], [], []>} : vector<16x8xf32>, vector<8x256xf32>, vector<16x256xf32> -> vector<16x256xf32>
    %16 = vector.broadcast %14 : vector<16x1xf32> to vector<16x256xf32>
    %17 = arith.addf %15, %16 : vector<16x256xf32>
    %cst_16 = arith.constant 0.000000e+00 : f32
    %18 = vector.broadcast %cst_16 : f32 to vector<16x256xf32>
    %19 = arith.maximumf %17, %18 : vector<16x256xf32>
    %c0_17 = arith.constant 0 : index
    %c0_18 = arith.constant 0 : index
    %20 = vector.load %arg8[%c0_17, %c0_18] : memref<32x16xf32, #tpu.memory_space<vmem>>, vector<32x16xf32>
    %c0_19 = arith.constant 0 : index
    %c0_20 = arith.constant 0 : index
    %21 = vector.load %arg9[%c0_19, %c0_20] : memref<32x1xf32, #tpu.memory_space<vmem>>, vector<32x1xf32>
    %cst_21 = arith.constant dense<0.000000e+00> : vector<32x256xf32>
    %22 = tpu.matmul %20, %19, %cst_21 {dimension_numbers = #tpu.dot_dimension_numbers<[1], [0], [0], [1], [0, 0, 1, 1], [], []>} : vector<32x16xf32>, vector<16x256xf32>, vector<32x256xf32> -> vector<32x256xf32>
    %23 = vector.broadcast %21 : vector<32x1xf32> to vector<32x256xf32>
    %24 = arith.addf %22, %23 : vector<32x256xf32>
    %25 = arith.addf %24, %0 : vector<32x256xf32>
    %c0_22 = arith.constant 0 : index
    %c0_23 = arith.constant 0 : index
    %26 = vector.load %arg10[%c0_22, %c0_23] : memref<32x256xf32, #tpu.memory_space<vmem>>, vector<32x256xf32>
    tpu.vector_store %arg10[%c0_22, %c0_23], %25 {strides = array<i32>} : memref<32x256xf32, #tpu.memory_space<vmem>>, vector<32x256xf32>,
    return
  }
  func.func @transform_0(%arg0: i32) -> (i32, i32) {
    %c0_i32 = arith.constant 0 : i32
    %c0_i32_0 = arith.constant 0 : i32
    return %c0_i32, %arg0 : i32, i32
  }
  func.func @transform_1(%arg0: i32) -> (i32, i32) {
    %c0_i32 = arith.constant 0 : i32
    %c0_i32_0 = arith.constant 0 : i32
    %c0_i32_1 = arith.constant 0 : i32
    return %c0_i32, %c0_i32_0 : i32, i32
  }
  func.func @transform_2(%arg0: i32) -> (i32, i32) {
    %c0_i32 = arith.constant 0 : i32
    %c0_i32_0 = arith.constant 0 : i32
    %c0_i32_1 = arith.constant 0 : i32
    return %c0_i32, %c0_i32_0 : i32, i32
  }
  func.func @transform_3(%arg0: i32) -> (i32, i32) {
    %c0_i32 = arith.constant 0 : i32
    %c0_i32_0 = arith.constant 0 : i32
    %c0_i32_1 = arith.constant 0 : i32
    return %c0_i32, %c0_i32_0 : i32, i32
  }
  func.func @transform_4(%arg0: i32) -> (i32, i32) {
    %c0_i32 = arith.constant 0 : i32
    %c0_i32_0 = arith.constant 0 : i32
    %c0_i32_1 = arith.constant 0 : i32
    return %c0_i32, %c0_i32_0 : i32, i32
  }
  func.func @transform_5(%arg0: i32) -> (i32, i32) {
    %c0_i32 = arith.constant 0 : i32
    %c0_i32_0 = arith.constant 0 : i32
    %c0_i32_1 = arith.constant 0 : i32
    return %c0_i32, %c0_i32_0 : i32, i32
  }
  func.func @transform_6(%arg0: i32) -> (i32, i32) {
    %c0_i32 = arith.constant 0 : i32
    %c0_i32_0 = arith.constant 0 : i32
    %c0_i32_1 = arith.constant 0 : i32
    return %c0_i32, %c0_i32_0 : i32, i32
  }
  func.func @transform_7(%arg0: i32) -> (i32, i32) {
    %c0_i32 = arith.constant 0 : i32
    %c0_i32_0 = arith.constant 0 : i32
    %c0_i32_1 = arith.constant 0 : i32
    return %c0_i32, %c0_i32_0 : i32, i32
  }
  func.func @transform_8(%arg0: i32) -> (i32, i32) {
    %c0_i32 = arith.constant 0 : i32
    %c0_i32_0 = arith.constant 0 : i32
    %c0_i32_1 = arith.constant 0 : i32
    return %c0_i32, %c0_i32_0 : i32, i32
  }
  func.func @transform_9(%arg0: i32) -> (i32, i32) {
    %c0_i32 = arith.constant 0 : i32
    %c0_i32_0 = arith.constant 0 : i32
    return %c0_i32, %arg0 : i32, i32
  }
}

</mosaic_0001>

<llo_original>
// kernel: tpu_custom_call.1
$region0: #{tpu_custom_call.1}
  #allocation0 [shape = 'u32[]', space=smem, size = 0x4, offset = 0x4, fixed_abs, tag = 'smem constant byte address 0x4 - core index']
  #allocation1 [shape = 'u32[144,128]{1,0:T(1,128)}', space=vmem, size = 0x12000, scoped, tag = 'internal scratch']
  %s0 = inlined_call_operand.vmem [shape: f32[32,512], index: 0, kind: input, shape index: {}]
  %s1 = inlined_call_operand.hbm [shape: f32[16,32], index: 1, kind: input, shape index: {}]
  %s2 = inlined_call_operand.vmem [shape: f32[16,1], index: 2, kind: input, shape index: {}]
  %s3 = inlined_call_operand.hbm [shape: f32[8,16], index: 3, kind: input, shape index: {}]
  %s4 = inlined_call_operand.vmem [shape: f32[8,1], index: 4, kind: input, shape index: {}]
  %s5 = inlined_call_operand.vmem [shape: f32[16,8], index: 5, kind: input, shape index: {}]
  %s6 = inlined_call_operand.vmem [shape: f32[16,1], index: 6, kind: input, shape index: {}]
  %s7 = inlined_call_operand.vmem [shape: f32[32,16], index: 7, kind: input, shape index: {}]
  %s8 = inlined_call_operand.vmem [shape: f32[32,1], index: 8, kind: input, shape index: {}]
  %s9 = inlined_call_operand.hbm [shape: f32[32,512], index: 9, kind: output, shape index: {}]
  %s10 = sld [smem:[#allocation0]]
  $region100: #{tpu_custom_call.1} parent=0
    _
  %s12 = ssub.s32 1, %s10
  %s13 = scalar_select 0, %s12, %s10
  $region1: #{tpu_custom_call.1} parent=0
    #allocation2 [shape = 'u8[65536]{0}', space=vmem, size = 0x10000, scoped, tag = 'input window, operand 0']
    #allocation3 [shape = 'u8[8192]{0}', space=vmem, size = 0x2000, scoped, tag = 'input window, operand 1, single buffered']
    #allocation4 [shape = 's32[2]{0}', space=sflag, size = 0x8, scoped, tag = 'scoped memory for tpu_custom_call.1']
    #allocation5 [shape = 's32[2]{0}', space=sflag, size = 0x8, scoped, tag = 'scoped memory for tpu_custom_call.1']
    #allocation6 [shape = 'u8[4096]{0}', space=vmem, size = 0x1000, scoped, tag = 'input window, operand 3, single buffered']
    #allocation7 [shape = 's32[1]{0}', space=sflag, size = 0x4, scoped, tag = 'scoped memory for tpu_custom_call.1']
    #allocation8 [shape = 'u8[65536]{0}', space=vmem, size = 0x10000, scoped, tag = 'output window, operand 0']
    %14 = vsyncpa [#allocation4], 0
    %15 = vsyncpa [#allocation7], 0
    %16 = vsyncpa [#allocation5], 0
    %s17 = scalar_lea.sflag [#allocation5], 1
    %18 = vsyncpa %s17, 0
    loop: start=0, step=1, limit=4
    $region2: #{tpu_custom_call.1} parent=1 // loop_pre_header
      _
    $region3: #{tpu_custom_call.1} parent=1 // loop_header
      %s20 = sphi 0, %s24
      %p21 = scmp.ge.s32.totalorder %s20, 4
      %s30 = sphi 0, %s32
      %s33 = sphi 0, %s30
      %s34 = sphi 0, %s33
      %s50 = sphi 0, %s34
      %s54 = sphi 0, %s54
      %s56 = sphi 0, %s54
      %s57 = sphi 0, %s56
      %s71 = sphi 0, %s57
      %s75 = sphi 0, %s75
      %s77 = sphi 0, %s75
      %s78 = sphi 0, %s77
      %s92 = sphi 0, %s78
      %s96 = sphi 0, %s96
      %s98 = sphi 0, %s96
      %s99 = sphi 0, %s98
      %s113 = sphi 0, %s99
      %s117 = sphi 0, %s117
      %s119 = sphi 0, %s117
      %s120 = sphi 0, %s119
      %s134 = sphi 0, %s120
      %s138 = sphi 0, %s138
      %s140 = sphi 0, %s138
      %s141 = sphi 0, %s140
      %s155 = sphi 0, %s141
      %s159 = sphi 0, %s159
      %s161 = sphi 0, %s159
      %s162 = sphi 0, %s161
      %s176 = sphi 0, %s162
      %s180 = sphi 0, %s180
      %s182 = sphi 0, %s180
      %s183 = sphi 0, %s182
      %s197 = sphi 0, %s183
      %s201 = sphi 0, %s201
      %s203 = sphi 0, %s201
      %s204 = sphi 0, %s203
      %s218 = sphi 0, %s204
      %s224 = sphi 0, %s226
      %s227 = sphi 0, %s224
      %s228 = sphi 0, %s227
      %s244 = sphi 0, %s228
    $region4: #{tpu_custom_call.1} parent=1 // loop_header_branch
      %23 = sbr.rel (%p21) target = $region8
    $region5: #{tpu_custom_call.1} parent=1 // loop_body
      %s25 = ssub.s32 %s20, 1
      %s26 = ssub.s32 %s20, 2
      %s27 = sadd.s32 %s20, 1
      %s28 = ssub.s32 %s20, %s27
      %p29 = scmp.eq.s32.totalorder %s28, 0
      %s31 = sadd.s32 %s30, 1
      %s32 = scalar_select %p29, %s30, %s31
      %p35 = pneg %p29
      %p36 = scmp.eq.s32.totalorder %s20, 1
      %p37 = por %p35, %p36
      %p38 = scmp.ne.s32.totalorder %s30, %s33
      %p39 = scmp.eq.s32.totalorder %s20, 0
      %p40 = por %p38, %p39
      %p41 = scmp.ne.s32.totalorder %s30, %s33
      %p42 = scmp.eq.s32.totalorder %s25, 1
      %p43 = por %p41, %p42
      %p44 = scmp.ne.s32.totalorder %s33, %s34
      %p45 = scmp.eq.s32.totalorder %s25, 0
      %p46 = por %p44, %p45
      %p47 = scmp.ne.s32.totalorder %s33, %s34
      %p48 = scmp.eq.s32.totalorder %s26, 1
      %p49 = por %p47, %p48
      %p51 = scmp.ne.s32.totalorder %s34, %s50
      %p52 = scmp.eq.s32.totalorder %s26, 0
      %p53 = por %p51, %p52
      %s55 = sadd.s32 %s54, 1
      %p58 = scmp.eq.s32.totalorder %s20, 1
      %p59 = scmp.ne.s32.totalorder %s54, %s56
      %p60 = scmp.eq.s32.totalorder %s20, 0
      %p61 = por %p59, %p60
      %p62 = scmp.ne.s32.totalorder %s54, %s56
      %p63 = scmp.eq.s32.totalorder %s25, 1
      %p64 = por %p62, %p63
      %p65 = scmp.ne.s32.totalorder %s56, %s57
      %p66 = scmp.eq.s32.totalorder %s25, 0
      %p67 = por %p65, %p66
      %p68 = scmp.ne.s32.totalorder %s56, %s57
      %p69 = scmp.eq.s32.totalorder %s26, 1
      %p70 = por %p68, %p69
      %p72 = scmp.ne.s32.totalorder %s57, %s71
      %p73 = scmp.eq.s32.totalorder %s26, 0
      %p74 = por %p72, %p73
      %s76 = sadd.s32 %s75, 1
      %p79 = scmp.eq.s32.totalorder %s20, 1
      %p80 = scmp.ne.s32.totalorder %s75, %s77
      %p81 = scmp.eq.s32.totalorder %s20, 0
      %p82 = por %p80, %p81
      %p83 = scmp.ne.s32.totalorder %s75, %s77
      %p84 = scmp.eq.s32.totalorder %s25, 1
      %p85 = por %p83, %p84
      %p86 = scmp.ne.s32.totalorder %s77, %s78
      %p87 = scmp.eq.s32.totalorder %s25, 0
      %p88 = por %p86, %p87
      %p89 = scmp.ne.s32.totalorder %s77, %s78
      %p90 = scmp.eq.s32.totalorder %s26, 1
      %p91 = por %p89, %p90
      %p93 = scmp.ne.s32.totalorder %s78, %s92
      %p94 = scmp.eq.s32.totalorder %s26, 0
      %p95 = por %p93, %p94
      %s97 = sadd.s32 %s96, 1
      %p100 = scmp.eq.s32.totalorder %s20, 1
      %p101 = scmp.ne.s32.totalorder %s96, %s98
      %p102 = scmp.eq.s32.totalorder %s20, 0
      %p103 = por %p101, %p102
      %p104 = scmp.ne.s32.totalorder %s96, %s98
      %p105 = scmp.eq.s32.totalorder %s25, 1
      %p106 = por %p104, %p105
      %p107 = scmp.ne.s32.totalorder %s98, %s99
      %p108 = scmp.eq.s32.totalorder %s25, 0
      %p109 = por %p107, %p108
      %p110 = scmp.ne.s32.totalorder %s98, %s99
      %p111 = scmp.eq.s32.totalorder %s26, 1
      %p112 = por %p110, %p111
      %p114 = scmp.ne.s32.totalorder %s99, %s113
      %p115 = scmp.eq.s32.totalorder %s26, 0
      %p116 = por %p114, %p115
      %s118 = sadd.s32 %s117, 1
      %p121 = scmp.eq.s32.totalorder %s20, 1
      %p122 = scmp.ne.s32.totalorder %s117, %s119
      %p123 = scmp.eq.s32.totalorder %s20, 0
      %p124 = por %p122, %p123
      %p125 = scmp.ne.s32.totalorder %s117, %s119
      %p126 = scmp.eq.s32.totalorder %s25, 1
      %p127 = por %p125, %p126
      %p128 = scmp.ne.s32.totalorder %s119, %s120
      %p129 = scmp.eq.s32.totalorder %s25, 0
      %p130 = por %p128, %p129
      %p131 = scmp.ne.s32.totalorder %s119, %s120
      %p132 = scmp.eq.s32.totalorder %s26, 1
      %p133 = por %p131, %p132
      %p135 = scmp.ne.s32.totalorder %s120, %s134
      %p136 = scmp.eq.s32.totalorder %s26, 0
      %p137 = por %p135, %p136
      %s139 = sadd.s32 %s138, 1
      %p142 = scmp.eq.s32.totalorder %s20, 1
      %p143 = scmp.ne.s32.totalorder %s138, %s140
      %p144 = scmp.eq.s32.totalorder %s20, 0
      %p145 = por %p143, %p144
      %p146 = scmp.ne.s32.totalorder %s138, %s140
      %p147 = scmp.eq.s32.totalorder %s25, 1
      %p148 = por %p146, %p147
      %p149 = scmp.ne.s32.totalorder %s140, %s141
      %p150 = scmp.eq.s32.totalorder %s25, 0
      %p151 = por %p149, %p150
      %p152 = scmp.ne.s32.totalorder %s140, %s141
      %p153 = scmp.eq.s32.totalorder %s26, 1
      %p154 = por %p152, %p153
      %p156 = scmp.ne.s32.totalorder %s141, %s155
      %p157 = scmp.eq.s32.totalorder %s26, 0
      %p158 = por %p156, %p157
      %s160 = sadd.s32 %s159, 1
      %p163 = scmp.eq.s32.totalorder %s20, 1
      %p164 = scmp.ne.s32.totalorder %s159, %s161
      %p165 = scmp.eq.s32.totalorder %s20, 0
      %p166 = por %p164, %p165
      %p167 = scmp.ne.s32.totalorder %s159, %s161
      %p168 = scmp.eq.s32.totalorder %s25, 1
      %p169 = por %p167, %p168
      %p170 = scmp.ne.s32.totalorder %s161, %s162
      %p171 = scmp.eq.s32.totalorder %s25, 0
      %p172 = por %p170, %p171
      %p173 = scmp.ne.s32.totalorder %s161, %s162
      %p174 = scmp.eq.s32.totalorder %s26, 1
      %p175 = por %p173, %p174
      %p177 = scmp.ne.s32.totalorder %s162, %s176
      %p178 = scmp.eq.s32.totalorder %s26, 0
      %p179 = por %p177, %p178
      %s181 = sadd.s32 %s180, 1
      %p184 = scmp.eq.s32.totalorder %s20, 1
      %p185 = scmp.ne.s32.totalorder %s180, %s182
      %p186 = scmp.eq.s32.totalorder %s20, 0
      %p187 = por %p185, %p186
      %p188 = scmp.ne.s32.totalorder %s180, %s182
      %p189 = scmp.eq.s32.totalorder %s25, 1
      %p190 = por %p188, %p189
      %p191 = scmp.ne.s32.totalorder %s182, %s183
      %p192 = scmp.eq.s32.totalorder %s25, 0
      %p193 = por %p191, %p192
      %p194 = scmp.ne.s32.totalorder %s182, %s183
      %p195 = scmp.eq.s32.totalorder %s26, 1
      %p196 = por %p194, %p195
      %p198 = scmp.ne.s32.totalorder %s183, %s197
      %p199 = scmp.eq.s32.totalorder %s26, 0
      %p200 = por %p198, %p199
      %s202 = sadd.s32 %s201, 1
      %p205 = scmp.eq.s32.totalorder %s20, 1
      %p206 = scmp.ne.s32.totalorder %s201, %s203
      %p207 = scmp.eq.s32.totalorder %s20, 0
      %p208 = por %p206, %p207
      %p209 = scmp.ne.s32.totalorder %s201, %s203
      %p210 = scmp.eq.s32.totalorder %s25, 1
      %p211 = por %p209, %p210
      %p212 = scmp.ne.s32.totalorder %s203, %s204
      %p213 = scmp.eq.s32.totalorder %s25, 0
      %p214 = por %p212, %p213
      %p215 = scmp.ne.s32.totalorder %s203, %s204
      %p216 = scmp.eq.s32.totalorder %s26, 1
      %p217 = por %p215, %p216
      %p219 = scmp.ne.s32.totalorder %s204, %s218
      %p220 = scmp.eq.s32.totalorder %s26, 0
      %p221 = por %p219, %p220
      %s222 = ssub.s32 %s20, %s27
      %p223 = scmp.eq.s32.totalorder %s222, 0
      %s225 = sadd.s32 %s224, 1
      %s226 = scalar_select %p223, %s224, %s225
      %p229 = pneg %p223
      %p230 = scmp.eq.s32.totalorder %s20, 1
      %p231 = por %p229, %p230
      %p232 = scmp.ne.s32.totalorder %s224, %s227
      %p233 = scmp.eq.s32.totalorder %s20, 0
      %p234 = por %p232, %p233
      %p235 = scmp.ne.s32.totalorder %s224, %s227
      %p236 = scmp.eq.s32.totalorder %s25, 1
      %p237 = por %p235, %p236
      %p238 = scmp.ne.s32.totalorder %s227, %s228
      %p239 = scmp.eq.s32.totalorder %s25, 0
      %p240 = por %p238, %p239
      %p241 = scmp.ne.s32.totalorder %s227, %s228
      %p242 = scmp.eq.s32.totalorder %s26, 1
      %p243 = por %p241, %p242
      %p245 = scmp.ne.s32.totalorder %s228, %s244
      %p246 = scmp.eq.s32.totalorder %s26, 0
      %p247 = por %p245, %p246
      %p248 = scmp.le.s32.totalorder 1, %s20
      %p249 = scmp.lt.s32.totalorder %s20, 3
      %p250 = pnand %p248, %p249
      %p251 = pneg %p250
      // Predicated region
      $region9: #{tpu_custom_call.1} parent=5 // pred_check
        _
      $region10: #{tpu_custom_call.1} parent=5 // pred_check_branch
        %253 = sbr.rel (%p250) target = $region12
      $region11: #{tpu_custom_call.1} parent=5 // pred_region
        %s254 = ssub.s32 %s20, 1
        // Predicated region
        $region13: #{tpu_custom_call.1} parent=11 // pred_check
          %p255 = pneg %p67
        $region14: #{tpu_custom_call.1} parent=11 // pred_check_branch
          %257 = sbr.rel (%p255) target = $region16
        $region15: #{tpu_custom_call.1} parent=11 // pred_region
          %s259 = ssub.s32 256, 256
          %260 = vsyncadd [#allocation4], %s259
          %s261 = sshll.u32 [#allocation3], 4
          %s262 = int_to_ptr.vmem [resolvable:$true] %s261
          %267 = dma.hbm_to_vmem [thread:$0]  %s1, 256, %s262, [#allocation4], 128, 128, 8
        $region16: #{tpu_custom_call.1} parent=11 // pred_fallthru
          _
        // Predicated region
        $region17: #{tpu_custom_call.1} parent=11 // pred_check
          %p268 = pneg %p88
        $region18: #{tpu_custom_call.1} parent=11 // pred_check_branch
          %270 = sbr.rel (%p268) target = $region20
        $region19: #{tpu_custom_call.1} parent=11 // pred_region
          _
        $region20: #{tpu_custom_call.1} parent=11 // pred_fallthru
          _
        // Predicated region
        $region21: #{tpu_custom_call.1} parent=11 // pred_check
          %p271 = pneg %p109
        $region22: #{tpu_custom_call.1} parent=11 // pred_check_branch
          %273 = sbr.rel (%p271) target = $region24
        $region23: #{tpu_custom_call.1} parent=11 // pred_region
          %s275 = ssub.s32 128, 128
          %276 = vsyncadd [#allocation7], %s275
          %s278 = sshll.u32 [#allocation6], 4
          %s279 = int_to_ptr.vmem [resolvable:$true] %s278
          %281 = dma.hbm_to_vmem [thread:$0]  %s3, 128, %s279, [#allocation7]
        $region24: #{tpu_custom_call.1} parent=11 // pred_fallthru
          _
        // Predicated region
        $region25: #{tpu_custom_call.1} parent=11 // pred_check
          %p282 = pneg %p130
        $region26: #{tpu_custom_call.1} parent=11 // pred_check_branch
          %284 = sbr.rel (%p282) target = $region28
        $region27: #{tpu_custom_call.1} parent=11 // pred_region
          _
        $region28: #{tpu_custom_call.1} parent=11 // pred_fallthru
          _
        // Predicated region
        $region29: #{tpu_custom_call.1} parent=11 // pred_check
          %p285 = pneg %p151
        $region30: #{tpu_custom_call.1} parent=11 // pred_check_branch
          %287 = sbr.rel (%p285) target = $region32
        $region31: #{tpu_custom_call.1} parent=11 // pred_region
          _
        $region32: #{tpu_custom_call.1} parent=11 // pred_fallthru
          _
        // Predicated region
        $region33: #{tpu_custom_call.1} parent=11 // pred_check
          %p288 = pneg %p172
        $region34: #{tpu_custom_call.1} parent=11 // pred_check_branch
          %290 = sbr.rel (%p288) target = $region36
        $region35: #{tpu_custom_call.1} parent=11 // pred_region
          _
        $region36: #{tpu_custom_call.1} parent=11 // pred_fallthru
          _
        // Predicated region
        $region37: #{tpu_custom_call.1} parent=11 // pred_check
          %p291 = pneg %p193
        $region38: #{tpu_custom_call.1} parent=11 // pred_check_branch
          %293 = sbr.rel (%p291) target = $region40
        $region39: #{tpu_custom_call.1} parent=11 // pred_region
          _
        $region40: #{tpu_custom_call.1} parent=11 // pred_fallthru
          _
        // Predicated region
        $region41: #{tpu_custom_call.1} parent=11 // pred_check
          %p294 = pneg %p214
        $region42: #{tpu_custom_call.1} parent=11 // pred_check_branch
          %296 = sbr.rel (%p294) target = $region44
        $region43: #{tpu_custom_call.1} parent=11 // pred_region
          _
        $region44: #{tpu_custom_call.1} parent=11 // pred_fallthru
          _
      $region12: #{tpu_custom_call.1} parent=5 // pred_fallthru
        _
      %p297 = scmp.lt.s32.totalorder %s20, 2
      // Predicated region
      $region45: #{tpu_custom_call.1} parent=5 // pred_check
        %p298 = pneg %p297
      $region46: #{tpu_custom_call.1} parent=5 // pred_check_branch
        %300 = sbr.rel (%p298) target = $region48
      $region47: #{tpu_custom_call.1} parent=5 // pred_region
        // Predicated region
        $region49: #{tpu_custom_call.1} parent=47 // pred_check
          %p301 = pneg %p40
        $region50: #{tpu_custom_call.1} parent=47 // pred_check_branch
          %303 = sbr.rel (%p301) target = $region52
        $region51: #{tpu_custom_call.1} parent=47 // pred_region
          %s304 = sand.u32 %s30, 1
          %s305 = sand.u32 %s30, 1
          %s306 = smul.addr %s305, 64
          %s307 = scalar_lea.vmem [#allocation2], %s306
          %s308 = smul.u32 2, %s20
          %s309 = smul.addr %s308, 8
          %s310 = scalar_lea.vmem %s0, %s309
          // Predicated region
          $region53: #{tpu_custom_call.1} parent=51 // pred_check
            _
          $region54: #{tpu_custom_call.1} parent=51 // pred_check_branch
            %312 = sbr.rel (0) target = $region56
          $region55: #{tpu_custom_call.1} parent=51 // pred_region
            // Predicated region
            $region57: #{tpu_custom_call.1} parent=55 // pred_check
              _
            $region58: #{tpu_custom_call.1} parent=55 // pred_check_branch
              %314 = sbr.rel (0) target = $region60
            $region59: #{tpu_custom_call.1} parent=55 // pred_region
              loop: start=0, step=1, limit=1
              $region61: #{tpu_custom_call.1} parent=59 // loop_pre_header
                _
              $region62: #{tpu_custom_call.1} parent=59 // loop_header
                %s316 = sphi 0, %s320
                %p317 = scmp.ge.s32.totalorder %s316, 1
                %s321 = sphi %s310, %s310
                %s322 = sphi %s307, %s307
              $region63: #{tpu_custom_call.1} parent=59 // loop_header_branch
                %319 = sbr.rel (%p317) target = $region67
              $region64: #{tpu_custom_call.1} parent=59 // loop_body
                %v323 = vld [vmem:[%s321] sm:$0xff]
                %324 = vst [vmem:[%s322] sm:$0xff] %v323
                %v325 = vld [vmem:[%s321 + $0x8] sm:$0xff]
                %326 = vst [vmem:[%s322 + $0x8] sm:$0xff] %v325
                %v327 = vld [vmem:[%s321 + $0x20] sm:$0xff]
                %328 = vst [vmem:[%s322 + $0x10] sm:$0xff] %v327
                %v329 = vld [vmem:[%s321 + $0x28] sm:$0xff]
                %330 = vst [vmem:[%s322 + $0x18] sm:$0xff] %v329
                %v331 = vld [vmem:[%s321 + $0x40] sm:$0xff]
                %332 = vst [vmem:[%s322 + $0x20] sm:$0xff] %v331
                %v333 = vld [vmem:[%s321 + $0x48] sm:$0xff]
                %334 = vst [vmem:[%s322 + $0x28] sm:$0xff] %v333
                %v335 = vld [vmem:[%s321 + $0x60] sm:$0xff]
                %336 = vst [vmem:[%s322 + $0x30] sm:$0xff] %v335
                %v337 = vld [vmem:[%s321 + $0x68] sm:$0xff]
                %338 = vst [vmem:[%s322 + $0x38] sm:$0xff] %v337
              $region65: #{tpu_custom_call.1} parent=59 // loop_footer
                %s320 = sadd.s32 1, %s316
              $region66: #{tpu_custom_call.1} parent=59 // loop_footer_branch
                %315 = sbr.rel target = $region62
              $region67: #{tpu_custom_call.1} parent=59 // loop_exit
                _
            $region60: #{tpu_custom_call.1} parent=55 // pred_fallthru
              _
            // Predicated region
            $region68: #{tpu_custom_call.1} parent=55 // pred_check
              _
            $region69: #{tpu_custom_call.1} parent=55 // pred_check_branch
              %340 = sbr.rel target = $region71
            $region70: #{tpu_custom_call.1} parent=55 // pred_region
              _
            $region71: #{tpu_custom_call.1} parent=55 // pred_fallthru
              _
          $region56: #{tpu_custom_call.1} parent=51 // pred_fallthru
            _
          %341 = vnop
        $region52: #{tpu_custom_call.1} parent=47 // pred_fallthru
          _
      $region48: #{tpu_custom_call.1} parent=5 // pred_fallthru
        _
      %p342 = scmp.le.s32.totalorder 1, %s20
      %p343 = scmp.lt.s32.totalorder %s20, 3
      %p344 = pnand %p342, %p343
      %p345 = pneg %p344
      // Predicated region
      $region72: #{tpu_custom_call.1} parent=5 // pred_check
        _
      $region73: #{tpu_custom_call.1} parent=5 // pred_check_branch
        %347 = sbr.rel (%p344) target = $region75
      $region74: #{tpu_custom_call.1} parent=5 // pred_region
        %s348 = ssub.s32 %s20, 1
        %s349 = sand.u32 %s33, 1
        %s350 = sand.u32 %s33, 1
        %s351 = smul.addr %s350, 64
        %s352 = scalar_lea.vmem [#allocation2], %s351
        // Predicated region
        $region76: #{tpu_custom_call.1} parent=74 // pred_check
          %p353 = pneg %p46
        $region77: #{tpu_custom_call.1} parent=74 // pred_check_branch
          %355 = sbr.rel (%p353) target = $region79
        $region78: #{tpu_custom_call.1} parent=74 // pred_region
          _
        $region79: #{tpu_custom_call.1} parent=74 // pred_fallthru
          _
        // Predicated region
        $region80: #{tpu_custom_call.1} parent=74 // pred_check
          %p356 = pneg %p67
        $region81: #{tpu_custom_call.1} parent=74 // pred_check_branch
          %358 = sbr.rel (%p356) target = $region83
        $region82: #{tpu_custom_call.1} parent=74 // pred_region
          %359 = dma.done [#allocation4], 256
        $region83: #{tpu_custom_call.1} parent=74 // pred_fallthru
          _
        // Predicated region
        $region84: #{tpu_custom_call.1} parent=74 // pred_check
          %p360 = pneg %p109
        $region85: #{tpu_custom_call.1} parent=74 // pred_check_branch
          %362 = sbr.rel (%p360) target = $region87
        $region86: #{tpu_custom_call.1} parent=74 // pred_region
          %363 = dma.done [#allocation7], 128
        $region87: #{tpu_custom_call.1} parent=74 // pred_fallthru
          _
        %s364 = sand.u32 %s33, 1
        %s365 = sand.u32 %s33, 1
        %s366 = smul.addr %s365, 64
        %s367 = scalar_lea.vmem [#allocation2], %s366
        %p368 = pneg %p46
        %p369 = pneg %p43
        %p370 = pneg %p67
        %p371 = pneg %p64
        %p372 = pneg %p88
        %p373 = pneg %p85
        %p374 = pneg %p109
        %p375 = pneg %p106
        %p376 = pneg %p130
        %p377 = pneg %p127
        %p378 = pneg %p151
        %p379 = pneg %p148
        %p380 = pneg %p172
        %p381 = pneg %p169
        %p382 = pneg %p193
        %p383 = pneg %p190
        %p384 = pneg %p214
        %p385 = pneg %p211
        %p386 = pneg %p240
        %p387 = pneg %p237
        %s388 = sand.u32 %s227, 1
        %s389 = scalar_lea.sflag [#allocation5], %s388
        %s390 = sand.u32 %s227, 1
        %s391 = smul.addr %s390, 64
        %s392 = scalar_lea.vmem [#allocation8], %s391
        %s393 = smul.u32 2, %s25
        %s394 = smul.u32 2, %s25
        %v395 = vld [vmem:[%s352] sm:$0xff]
        %v396 = vld [vmem:[%s352 + $0x8] sm:$0xff]
        %v397 = vld [vmem:[%s352 + $0x10] sm:$0xff]
        %v398 = vld [vmem:[%s352 + $0x18] sm:$0xff]
        %v399 = vld [vmem:[%s352 + $0x20] sm:$0xff]
        %v400 = vld [vmem:[%s352 + $0x28] sm:$0xff]
        %v401 = vld [vmem:[%s352 + $0x30] sm:$0xff]
        %v402 = vld [vmem:[%s352 + $0x38] sm:$0xff]
        %v403 = vld [vmem:[#allocation3] sm:$0xff]
        %v404 = vld [vmem:[#allocation3 + $0x8] sm:$0xff]
        %v405 = vld [vmem:[%s2] sm:$0xff]
        %v406 = vld [vmem:[%s2 + $0x8] sm:$0xff]
        %408 = vset.pattern.permute.xlu0 0
        %409 = vperm.xlu0 %408, %v405
        %v410 = vpop.permute.xlu0 %409
        %413 = vset.pattern.permute.xlu0 0
        %414 = vperm.xlu0 %413, %v406
        %v415 = vpop.permute.xlu0 %414
        %vm417 = vcmask 261120
        %v419 = vsel %vm417, %v403, 0
        %v422 = vsel %vm417, %v404, 0
        %424 = vmatprep.subr.mxu0 0.0
        %425 = vmatpush1.msra.mxu0 0.0
        %426 = vmatprep.subr.mxu0 0.0
        %427 = vmatpush1.msra.mxu0 0.0
        %428 = vmatprep.subr.mxu0 0.0
        %429 = vmatpush1.msra.mxu0 0.0
        %430 = vmatprep.subr.mxu0 0.0
        %431 = vmatpush1.msra.mxu0 0.0
        %432 = vmatprep.subr.mxu0 0.0
        %433 = vmatpush1.msra.mxu0 0.0
        %434 = vmatprep.subr.mxu0 0.0
        %435 = vmatpush1.msra.mxu0 0.0
        %436 = vmatprep.subr.mxu0 0.0
        %437 = vmatpush1.msra.mxu0 0.0
        %438 = vmatprep.subr.mxu0 0.0
        %439 = vmatpush1.msra.mxu0 0.0
        %440 = vmatprep.subr.mxu0 0.0
        %441 = vmatpush1.msra.mxu0 0.0
        %442 = vmatprep.subr.mxu0 0.0
        %443 = vmatpush1.msra.mxu0 0.0
        %444 = vmatprep.subr.mxu0 0.0
        %445 = vmatpush1.msra.mxu0 0.0
        %446 = vmatprep.subr.mxu0 0.0
        %447 = vmatpush1.msra.mxu0 0.0
        %448 = vmatprep.subr.mxu0 %v402
        %449 = vmatpush1.msra.mxu0 %v401
        %450 = vmatprep.subr.mxu0 %v400
        %451 = vmatpush1.msra.mxu0 %v399
        %452 = vmatprep.subr.mxu0 %v398
        %453 = vmatpush1.msra.mxu0 %v397
        %454 = vmatprep.subr.mxu0 %v396
        %455 = vmatpush1.msra.mxu0 %v395
        %456 = vmatprep.subr.mxu0 0.0
        %457 = vmatpush2.msra.mxu0 0.0
        %458 = vmatprep.subr.mxu0 0.0
        %459 = vmatpush2.msra.mxu0 0.0
        %460 = vmatprep.subr.mxu0 0.0
        %461 = vmatpush2.msra.mxu0 0.0
        %462 = vmatprep.subr.mxu0 0.0
        %463 = vmatpush2.msra.mxu0 0.0
        %464 = vmatprep.subr.mxu0 0.0
        %465 = vmatpush2.msra.mxu0 0.0
        %466 = vmatprep.subr.mxu0 0.0
        %467 = vmatpush2.msra.mxu0 0.0
        %468 = vmatprep.subr.mxu0 0.0
        %469 = vmatpush2.msra.mxu0 0.0
        %470 = vmatprep.subr.mxu0 0.0
        %471 = vmatpush2.msra.mxu0 0.0
        %472 = vmatprep.subr.mxu0 0.0
        %473 = vmatpush2.msra.mxu0 0.0
        %474 = vmatprep.subr.mxu0 0.0
        %475 = vmatpush2.msra.mxu0 0.0
        %476 = vmatprep.subr.mxu0 0.0
        %477 = vmatpush2.msra.mxu0 0.0
        %478 = vmatprep.subr.mxu0 0.0
        %479 = vmatpush2.msra.mxu0 0.0
        %480 = vmatprep.subr.mxu0 0.0
        %481 = vmatpush2.msra.mxu0 0.0
        %482 = vmatprep.subr.mxu0 0.0
        %483 = vmatpush2.msra.mxu0 0.0
        %484 = vmatprep.subr.mxu0 0.0
        %485 = vmatpush2.msra.mxu0 0.0
        %486 = vmatprep.subr.mxu0 0.0
        %487 = vmatpush2.msra.mxu0 0.0
        %488 = vmatprep.mubr.f32.mxu0 0.0
        %489 = vmatmul.mubr.f32.gmra.mxu0 %v419
        %v490 = vpop.f32.mrf.mxu0
        %v491 = vadd.f32 %v410, %v490
        %v492 = vpop.f32.mrf.mxu0
        %v493 = vadd.f32 %v410, %v492
        %494 = vmatprep.mubr.f32.mxu0 0.0
        %495 = vmatmul.mubr.f32.gmra.mxu0 %v422
        %v496 = vpop.f32.mrf.mxu0
        %v497 = vadd.f32 %v415, %v496
        %v498 = vpop.f32.mrf.mxu0
        %v499 = vadd.f32 %v415, %v498
        %500 = vdwg.mxu0
        %v501 = vmax.f32 %v491, 0.0
        %v502 = vmax.f32 %v493, 0.0
        %v503 = vmax.f32 %v497, 0.0
        %v504 = vmax.f32 %v499, 0.0
        %v505 = vld [vmem:[#allocation6] sm:$0xff]
        %v506 = vld [vmem:[%s4] sm:$0xff]
        %508 = vset.pattern.permute.xlu0 0
        %509 = vperm.xlu0 %508, %v506
        %v510 = vpop.permute.xlu0 %509
        %vm512 = vcmask 130048
        %v514 = vsel %vm512, %v505, 0
        %516 = vmatprep.subr.mxu0 0.0
        %517 = vmatpush1.msra.mxu0 0.0
        %518 = vmatprep.subr.mxu0 0.0
        %519 = vmatpush1.msra.mxu0 0.0
        %520 = vmatprep.subr.mxu0 0.0
        %521 = vmatpush1.msra.mxu0 0.0
        %522 = vmatprep.subr.mxu0 0.0
        %523 = vmatpush1.msra.mxu0 0.0
        %524 = vmatprep.subr.mxu0 0.0
        %525 = vmatpush1.msra.mxu0 0.0
        %526 = vmatprep.subr.mxu0 0.0
        %527 = vmatpush1.msra.mxu0 0.0
        %528 = vmatprep.subr.mxu0 0.0
        %529 = vmatpush1.msra.mxu0 0.0
        %530 = vmatprep.subr.mxu0 0.0
        %531 = vmatpush1.msra.mxu0 0.0
        %532 = vmatprep.subr.mxu0 0.0
        %533 = vmatpush1.msra.mxu0 0.0
        %534 = vmatprep.subr.mxu0 0.0
        %535 = vmatpush1.msra.mxu0 0.0
        %536 = vmatprep.subr.mxu0 0.0
        %537 = vmatpush1.msra.mxu0 0.0
        %538 = vmatprep.subr.mxu0 0.0
        %539 = vmatpush1.msra.mxu0 0.0
        %540 = vmatprep.subr.mxu0 0.0
        %541 = vmatpush1.msra.mxu0 0.0
        %542 = vmatprep.subr.mxu0 0.0
        %543 = vmatpush1.msra.mxu0 0.0
        %544 = vmatprep.subr.mxu0 %v504
        %545 = vmatpush1.msra.mxu0 %v503
        %546 = vmatprep.subr.mxu0 %v502
        %547 = vmatpush1.msra.mxu0 %v501
        %548 = vmatprep.subr.mxu0 0.0
        %549 = vmatpush2.msra.mxu0 0.0
        %550 = vmatprep.subr.mxu0 0.0
        %551 = vmatpush2.msra.mxu0 0.0
        %552 = vmatprep.subr.mxu0 0.0
        %553 = vmatpush2.msra.mxu0 0.0
        %554 = vmatprep.subr.mxu0 0.0
        %555 = vmatpush2.msra.mxu0 0.0
        %556 = vmatprep.subr.mxu0 0.0
        %557 = vmatpush2.msra.mxu0 0.0
        %558 = vmatprep.subr.mxu0 0.0
        %559 = vmatpush2.msra.mxu0 0.0
        %560 = vmatprep.subr.mxu0 0.0
        %561 = vmatpush2.msra.mxu0 0.0
        %562 = vmatprep.subr.mxu0 0.0
        %563 = vmatpush2.msra.mxu0 0.0
        %564 = vmatprep.subr.mxu0 0.0
        %565 = vmatpush2.msra.mxu0 0.0
        %566 = vmatprep.subr.mxu0 0.0
        %567 = vmatpush2.msra.mxu0 0.0
        %568 = vmatprep.subr.mxu0 0.0
        %569 = vmatpush2.msra.mxu0 0.0
        %570 = vmatprep.subr.mxu0 0.0
        %571 = vmatpush2.msra.mxu0 0.0
        %572 = vmatprep.subr.mxu0 0.0
        %573 = vmatpush2.msra.mxu0 0.0
        %574 = vmatprep.subr.mxu0 0.0
        %575 = vmatpush2.msra.mxu0 0.0
        %576 = vmatprep.subr.mxu0 0.0
        %577 = vmatpush2.msra.mxu0 0.0
        %578 = vmatprep.subr.mxu0 0.0
        %579 = vmatpush2.msra.mxu0 0.0
        %580 = vmatprep.mubr.f32.mxu0 0.0
        %581 = vmatmul.mubr.f32.gmra.mxu0 %v514
        %v582 = vpop.f32.mrf.mxu0
        %v583 = vadd.f32 %v510, %v582
        %v584 = vpop.f32.mrf.mxu0
        %v585 = vadd.f32 %v510, %v584
        %586 = vdwg.mxu0
        %v587 = vld [vmem:[%s5] sm:$0xff]
        %v588 = vld [vmem:[%s5 + $0x8] sm:$0xff]
        %v589 = vld [vmem:[%s6] sm:$0xff]
        %v590 = vld [vmem:[%s6 + $0x8] sm:$0xff]
        %592 = vset.pattern.permute.xlu0 0
        %593 = vperm.xlu0 %592, %v589
        %v594 = vpop.permute.xlu0 %593
        %597 = vset.pattern.permute.xlu0 0
        %598 = vperm.xlu0 %597, %v590
        %v599 = vpop.permute.xlu0 %598
        %vm601 = vcmask 64512
        %v603 = vsel %vm601, %v587, 0
        %v606 = vsel %vm601, %v588, 0
        %608 = vmatprep.subr.mxu0 0.0
        %609 = vmatpush1.msra.mxu0 0.0
        %610 = vmatprep.subr.mxu0 0.0
        %611 = vmatpush1.msra.mxu0 0.0
        %612 = vmatprep.subr.mxu0 0.0
        %613 = vmatpush1.msra.mxu0 0.0
        %614 = vmatprep.subr.mxu0 0.0
        %615 = vmatpush1.msra.mxu0 0.0
        %616 = vmatprep.subr.mxu0 0.0
        %617 = vmatpush1.msra.mxu0 0.0
        %618 = vmatprep.subr.mxu0 0.0
        %619 = vmatpush1.msra.mxu0 0.0
        %620 = vmatprep.subr.mxu0 0.0
        %621 = vmatpush1.msra.mxu0 0.0
        %622 = vmatprep.subr.mxu0 0.0
        %623 = vmatpush1.msra.mxu0 0.0
        %624 = vmatprep.subr.mxu0 0.0
        %625 = vmatpush1.msra.mxu0 0.0
        %626 = vmatprep.subr.mxu0 0.0
        %627 = vmatpush1.msra.mxu0 0.0
        %628 = vmatprep.subr.mxu0 0.0
        %629 = vmatpush1.msra.mxu0 0.0
        %630 = vmatprep.subr.mxu0 0.0
        %631 = vmatpush1.msra.mxu0 0.0
        %632 = vmatprep.subr.mxu0 0.0
        %633 = vmatpush1.msra.mxu0 0.0
        %634 = vmatprep.subr.mxu0 0.0
        %635 = vmatpush1.msra.mxu0 0.0
        %636 = vmatprep.subr.mxu0 0.0
        %637 = vmatpush1.msra.mxu0 0.0
        %638 = vmatprep.subr.mxu0 %v585
        %639 = vmatpush1.msra.mxu0 %v583
        %640 = vmatprep.subr.mxu0 0.0
        %641 = vmatpush2.msra.mxu0 0.0
        %642 = vmatprep.subr.mxu0 0.0
        %643 = vmatpush2.msra.mxu0 0.0
        %644 = vmatprep.subr.mxu0 0.0
        %645 = vmatpush2.msra.mxu0 0.0
        %646 = vmatprep.subr.mxu0 0.0
        %647 = vmatpush2.msra.mxu0 0.0
        %648 = vmatprep.subr.mxu0 0.0
        %649 = vmatpush2.msra.mxu0 0.0
        %650 = vmatprep.subr.mxu0 0.0
        %651 = vmatpush2.msra.mxu0 0.0
        %652 = vmatprep.subr.mxu0 0.0
        %653 = vmatpush2.msra.mxu0 0.0
        %654 = vmatprep.subr.mxu0 0.0
        %655 = vmatpush2.msra.mxu0 0.0
        %656 = vmatprep.subr.mxu0 0.0
        %657 = vmatpush2.msra.mxu0 0.0
        %658 = vmatprep.subr.mxu0 0.0
        %659 = vmatpush2.msra.mxu0 0.0
        %660 = vmatprep.subr.mxu0 0.0
        %661 = vmatpush2.msra.mxu0 0.0
        %662 = vmatprep.subr.mxu0 0.0
        %663 = vmatpush2.msra.mxu0 0.0
        %664 = vmatprep.subr.mxu0 0.0
        %665 = vmatpush2.msra.mxu0 0.0
        %666 = vmatprep.subr.mxu0 0.0
        %667 = vmatpush2.msra.mxu0 0.0
        %668 = vmatprep.subr.mxu0 0.0
        %669 = vmatpush2.msra.mxu0 0.0
        %670 = vmatprep.subr.mxu0 0.0
        %671 = vmatpush2.msra.mxu0 0.0
        %672 = vmatprep.mubr.f32.mxu0 0.0
        %673 = vmatmul.mubr.f32.gmra.mxu0 %v603
        %v674 = vpop.f32.mrf.mxu0
        %v675 = vadd.f32 %v594, %v674
        %v676 = vpop.f32.mrf.mxu0
        %v677 = vadd.f32 %v594, %v676
        %678 = vmatprep.mubr.f32.mxu0 0.0
        %679 = vmatmul.mubr.f32.gmra.mxu0 %v606
        %v680 = vpop.f32.mrf.mxu0
        %v681 = vadd.f32 %v599, %v680
        %v682 = vpop.f32.mrf.mxu0
        %v683 = vadd.f32 %v599, %v682
        %684 = vdwg.mxu0
        %v685 = vmax.f32 %v675, 0.0
        %v686 = vmax.f32 %v677, 0.0
        %v687 = vmax.f32 %v681, 0.0
        %v688 = vmax.f32 %v683, 0.0
        %v689 = vld [vmem:[%s7] sm:$0xff]
        %v690 = vld [vmem:[%s7 + $0x8] sm:$0xff]
        %v691 = vld [vmem:[%s7 + $0x10] sm:$0xff]
        %v692 = vld [vmem:[%s7 + $0x18] sm:$0xff]
        %v693 = vld [vmem:[%s8] sm:$0xff]
        %v694 = vld [vmem:[%s8 + $0x8] sm:$0xff]
        %v695 = vld [vmem:[%s8 + $0x10] sm:$0xff]
        %v696 = vld [vmem:[%s8 + $0x18] sm:$0xff]
        %698 = vset.pattern.permute.xlu0 0
        %699 = vperm.xlu0 %698, %v693
        %v700 = vpop.permute.xlu0 %699
        %703 = vset.pattern.permute.xlu0 0
        %704 = vperm.xlu0 %703, %v694
        %v705 = vpop.permute.xlu0 %704
        %708 = vset.pattern.permute.xlu0 0
        %709 = vperm.xlu0 %708, %v695
        %v710 = vpop.permute.xlu0 %709
        %713 = vset.pattern.permute.xlu0 0
        %714 = vperm.xlu0 %713, %v696
        %v715 = vpop.permute.xlu0 %714
        %v718 = vsel %vm512, %v689, 0
        %v721 = vsel %vm512, %v690, 0
        %v724 = vsel %vm512, %v691, 0
        %v727 = vsel %vm512, %v692, 0
        %729 = vmatprep.subr.mxu0 0.0
        %730 = vmatpush1.msra.mxu0 0.0
        %731 = vmatprep.subr.mxu0 0.0
        %732 = vmatpush1.msra.mxu0 0.0
        %733 = vmatprep.subr.mxu0 0.0
        %734 = vmatpush1.msra.mxu0 0.0
        %735 = vmatprep.subr.mxu0 0.0
        %736 = vmatpush1.msra.mxu0 0.0
        %737 = vmatprep.subr.mxu0 0.0
        %738 = vmatpush1.msra.mxu0 0.0
        %739 = vmatprep.subr.mxu0 0.0
        %740 = vmatpush1.msra.mxu0 0.0
        %741 = vmatprep.subr.mxu0 0.0
        %742 = vmatpush1.msra.mxu0 0.0
        %743 = vmatprep.subr.mxu0 0.0
        %744 = vmatpush1.msra.mxu0 0.0
        %745 = vmatprep.subr.mxu0 0.0
        %746 = vmatpush1.msra.mxu0 0.0
        %747 = vmatprep.subr.mxu0 0.0
        %748 = vmatpush1.msra.mxu0 0.0
        %749 = vmatprep.subr.mxu0 0.0
        %750 = vmatpush1.msra.mxu0 0.0
        %751 = vmatprep.subr.mxu0 0.0
        %752 = vmatpush1.msra.mxu0 0.0
        %753 = vmatprep.subr.mxu0 0.0
        %754 = vmatpush1.msra.mxu0 0.0
        %755 = vmatprep.subr.mxu0 0.0
        %756 = vmatpush1.msra.mxu0 0.0
        %757 = vmatprep.subr.mxu0 %v688
        %758 = vmatpush1.msra.mxu0 %v687
        %759 = vmatprep.subr.mxu0 %v686
        %760 = vmatpush1.msra.mxu0 %v685
        %761 = vmatprep.subr.mxu0 0.0
        %762 = vmatpush2.msra.mxu0 0.0
        %763 = vmatprep.subr.mxu0 0.0
        %764 = vmatpush2.msra.mxu0 0.0
        %765 = vmatprep.subr.mxu0 0.0
        %766 = vmatpush2.msra.mxu0 0.0
        %767 = vmatprep.subr.mxu0 0.0
        %768 = vmatpush2.msra.mxu0 0.0
        %769 = vmatprep.subr.mxu0 0.0
        %770 = vmatpush2.msra.mxu0 0.0
        %771 = vmatprep.subr.mxu0 0.0
        %772 = vmatpush2.msra.mxu0 0.0
        %773 = vmatprep.subr.mxu0 0.0
        %774 = vmatpush2.msra.mxu0 0.0
        %775 = vmatprep.subr.mxu0 0.0
        %776 = vmatpush2.msra.mxu0 0.0
        %777 = vmatprep.subr.mxu0 0.0
        %778 = vmatpush2.msra.mxu0 0.0
        %779 = vmatprep.subr.mxu0 0.0
        %780 = vmatpush2.msra.mxu0 0.0
        %781 = vmatprep.subr.mxu0 0.0
        %782 = vmatpush2.msra.mxu0 0.0
        %783 = vmatprep.subr.mxu0 0.0
        %784 = vmatpush2.msra.mxu0 0.0
        %785 = vmatprep.subr.mxu0 0.0
        %786 = vmatpush2.msra.mxu0 0.0
        %787 = vmatprep.subr.mxu0 0.0
        %788 = vmatpush2.msra.mxu0 0.0
        %789 = vmatprep.subr.mxu0 0.0
        %790 = vmatpush2.msra.mxu0 0.0
        %791 = vmatprep.subr.mxu0 0.0
        %792 = vmatpush2.msra.mxu0 0.0
        %793 = vmatprep.mubr.f32.mxu0 0.0
        %794 = vmatmul.mubr.f32.gmra.mxu0 %v718
        %v795 = vpop.f32.mrf.mxu0
        %v796 = vadd.f32 %v700, %v795
        %v797 = vpop.f32.mrf.mxu0
        %v798 = vadd.f32 %v700, %v797
        %799 = vmatprep.mubr.f32.mxu0 0.0
        %800 = vmatmul.mubr.f32.gmra.mxu0 %v721
        %v801 = vpop.f32.mrf.mxu0
        %v802 = vadd.f32 %v705, %v801
        %v803 = vpop.f32.mrf.mxu0
        %v804 = vadd.f32 %v705, %v803
        %805 = vmatprep.mubr.f32.mxu0 0.0
        %806 = vmatmul.mubr.f32.gmra.mxu0 %v724
        %v807 = vpop.f32.mrf.mxu0
        %v808 = vadd.f32 %v710, %v807
        %v809 = vpop.f32.mrf.mxu0
        %v810 = vadd.f32 %v710, %v809
        %811 = vmatprep.mubr.f32.mxu0 0.0
        %812 = vmatmul.mubr.f32.gmra.mxu0 %v727
        %v813 = vpop.f32.mrf.mxu0
        %v814 = vadd.f32 %v715, %v813
        %v815 = vpop.f32.mrf.mxu0
        %v816 = vadd.f32 %v715, %v815
        %817 = vdwg.mxu0
        %v818 = vadd.f32 %v796, %v395
        %v819 = vadd.f32 %v798, %v396
        %v820 = vadd.f32 %v802, %v397
        %v821 = vadd.f32 %v804, %v398
        %v822 = vadd.f32 %v808, %v399
        %v823 = vadd.f32 %v810, %v400
        %v824 = vadd.f32 %v814, %v401
        %v825 = vadd.f32 %v816, %v402
        %826 = vst [vmem:[%s392] sm:$0xff] %v818
        %827 = vst [vmem:[%s392 + $0x8] sm:$0xff] %v819
        %828 = vst [vmem:[%s392 + $0x10] sm:$0xff] %v820
        %829 = vst [vmem:[%s392 + $0x18] sm:$0xff] %v821
        %830 = vst [vmem:[%s392 + $0x20] sm:$0xff] %v822
        %831 = vst [vmem:[%s392 + $0x28] sm:$0xff] %v823
        %832 = vst [vmem:[%s392 + $0x30] sm:$0xff] %v824
        %833 = vst [vmem:[%s392 + $0x38] sm:$0xff] %v825
        %s834 = sand.u32 %s227, 1
        %s835 = scalar_lea.sflag [#allocation5], %s834
        %s836 = sand.u32 %s227, 1
        %s837 = smul.addr %s836, 64
        %s838 = scalar_lea.vmem [#allocation8], %s837
        // Predicated region
        $region88: #{tpu_custom_call.1} parent=74 // pred_check
          %p839 = pneg %p237
        $region89: #{tpu_custom_call.1} parent=74 // pred_check_branch
          %841 = sbr.rel (%p839) target = $region91
        $region90: #{tpu_custom_call.1} parent=74 // pred_region
          %s842 = smul.u32 2, %s25
          %s844 = ssub.s32 1024, 1024
          %845 = vsyncadd %s835, %s844
          %s846 = smul.addr %s842, 128
          %s847 = scalar_lea.hbm %s9, %s846
          %s848 = sshll.u32 %s838, 4
          %s849 = int_to_ptr.vmem [resolvable:$true] %s848
          %854 = dma.vmem_to_hbm [thread:$0]  %s849, 1024, %s847, %s835, 256, 512, 16
        $region91: #{tpu_custom_call.1} parent=74 // pred_fallthru
          _
      $region75: #{tpu_custom_call.1} parent=5 // pred_fallthru
        _
      %p855 = scmp.le.s32.totalorder 2, %s20
      // Predicated region
      $region92: #{tpu_custom_call.1} parent=5 // pred_check
        %p856 = pneg %p855
      $region93: #{tpu_custom_call.1} parent=5 // pred_check_branch
        %858 = sbr.rel (%p856) target = $region95
      $region94: #{tpu_custom_call.1} parent=5 // pred_region
        %s859 = ssub.s32 %s20, 2
        // Predicated region
        $region96: #{tpu_custom_call.1} parent=94 // pred_check
          %p860 = pneg %p243
        $region97: #{tpu_custom_call.1} parent=94 // pred_check_branch
          %862 = sbr.rel (%p860) target = $region99
        $region98: #{tpu_custom_call.1} parent=94 // pred_region
          %s863 = sand.u32 %s228, 1
          %s864 = scalar_lea.sflag [#allocation5], %s863
          %s865 = sand.u32 %s228, 1
          %s866 = smul.addr %s865, 64
          %s867 = scalar_lea.vmem [#allocation8], %s866
          %868 = dma.done %s864, 1024
        $region99: #{tpu_custom_call.1} parent=94 // pred_fallthru
          _
      $region95: #{tpu_custom_call.1} parent=5 // pred_fallthru
        _
    $region6: #{tpu_custom_call.1} parent=1 // loop_footer
      %s24 = sadd.s32 1, %s20
    $region7: #{tpu_custom_call.1} parent=1 // loop_footer_branch
      %19 = sbr.rel target = $region3
    $region8: #{tpu_custom_call.1} parent=1 // loop_exit
      _
    %869 = vsyncpa [#allocation4], 1
    %s870 = scalar_lea.sflag [#allocation4], 1
    %871 = vsyncpa %s870, 1
    %872 = vsyncpa [#allocation7], 1
    %873 = vsyncpa [#allocation5], 1
    %s874 = scalar_lea.sflag [#allocation5], 1
    %875 = vsyncpa %s874, 1

// kernel: tpu_custom_call.1
$region0: #{tpu_custom_call.1}
  #allocation0 [shape = 'u32[]', space=smem, size = 0x4, offset = 0x4, fixed_abs, tag = 'smem constant byte address 0x4 - core index']
  #allocation1 [shape = 'u32[144,128]{1,0:T(1,128)}', space=vmem, size = 0x12000, scoped, tag = 'internal scratch']
  %s0 = inlined_call_operand.vmem [shape: f32[32,512], index: 0, kind: input, shape index: {}]
  %s1 = inlined_call_operand.hbm [shape: f32[16,32], index: 1, kind: input, shape index: {}]
  %s2 = inlined_call_operand.vmem [shape: f32[16,1], index: 2, kind: input, shape index: {}]
  %s3 = inlined_call_operand.hbm [shape: f32[8,16], index: 3, kind: input, shape index: {}]
  %s4 = inlined_call_operand.vmem [shape: f32[8,1], index: 4, kind: input, shape index: {}]
  %s5 = inlined_call_operand.vmem [shape: f32[16,8], index: 5, kind: input, shape index: {}]
  %s6 = inlined_call_operand.vmem [shape: f32[16,1], index: 6, kind: input, shape index: {}]
  %s7 = inlined_call_operand.vmem [shape: f32[32,16], index: 7, kind: input, shape index: {}]
  %s8 = inlined_call_operand.vmem [shape: f32[32,1], index: 8, kind: input, shape index: {}]
  %s9 = inlined_call_operand.hbm [shape: f32[32,512], index: 9, kind: output, shape index: {}]
  %s10 = sld [smem:[#allocation0]]
  $region100: #{tpu_custom_call.1} parent=0
    _
  %s12 = ssub.s32 1, %s10
  %s13 = scalar_select 0, %s12, %s10
  $region1: #{tpu_custom_call.1} parent=0
    #allocation2 [shape = 'u8[65536]{0}', space=vmem, size = 0x10000, scoped, tag = 'input window, operand 0']
    #allocation3 [shape = 'u8[8192]{0}', space=vmem, size = 0x2000, scoped, tag = 'input window, operand 1, single buffered']
    #allocation4 [shape = 's32[2]{0}', space=sflag, size = 0x8, scoped, tag = 'scoped memory for tpu_custom_call.1']
    #allocation5 [shape = 's32[2]{0}', space=sflag, size = 0x8, scoped, tag = 'scoped memory for tpu_custom_call.1']
    #allocation6 [shape = 'u8[4096]{0}', space=vmem, size = 0x1000, scoped, tag = 'input window, operand 3, single buffered']
    #allocation7 [shape = 's32[1]{0}', space=sflag, size = 0x4, scoped, tag = 'scoped memory for tpu_custom_call.1']
    #allocation8 [shape = 'u8[65536]{0}', space=vmem, size = 0x10000, scoped, tag = 'output window, operand 0']
    %14 = vsyncpa [#allocation4], 0
    %15 = vsyncpa [#allocation7], 0
    %16 = vsyncpa [#allocation5], 0
    %s17 = scalar_lea.sflag [#allocation5], 1
    %18 = vsyncpa %s17, 0
    loop: start=0, step=1, limit=4
    $region2: #{tpu_custom_call.1} parent=1 // loop_pre_header
      _
    $region3: #{tpu_custom_call.1} parent=1 // loop_header
      %s20 = sphi 0, %s24
      %p21 = scmp.ge.s32.totalorder %s20, 4
      %s30 = sphi 0, %s32
      %s33 = sphi 0, %s30
      %s34 = sphi 0, %s33
      %s50 = sphi 0, %s34
      %s54 = sphi 0, %s54
      %s56 = sphi 0, %s54
      %s57 = sphi 0, %s56
      %s71 = sphi 0, %s57
      %s75 = sphi 0, %s75
      %s77 = sphi 0, %s75
      %s78 = sphi 0, %s77
      %s92 = sphi 0, %s78
      %s96 = sphi 0, %s96
      %s98 = sphi 0, %s96
      %s99 = sphi 0, %s98
      %s113 = sphi 0, %s99
      %s117 = sphi 0, %s117
      %s119 = sphi 0, %s117
      %s120 = sphi 0, %s119
      %s134 = sphi 0, %s120
      %s138 = sphi 0, %s138
      %s140 = sphi 0, %s138
      %s141 = sphi 0, %s140
      %s155 = sphi 0, %s141
      %s159 = sphi 0, %s159
      %s161 = sphi 0, %s159
      %s162 = sphi 0, %s161
      %s176 = sphi 0, %s162
      %s180 = sphi 0, %s180
      %s182 = sphi 0, %s180
      %s183 = sphi 0, %s182
      %s197 = sphi 0, %s183
      %s201 = sphi 0, %s201
      %s203 = sphi 0, %s201
      %s204 = sphi 0, %s203
      %s218 = sphi 0, %s204
      %s224 = sphi 0, %s226
      %s227 = sphi 0, %s224
      %s228 = sphi 0, %s227
      %s244 = sphi 0, %s228
    $region4: #{tpu_custom_call.1} parent=1 // loop_header_branch
      %23 = sbr.rel (%p21) target = $region8
    $region5: #{tpu_custom_call.1} parent=1 // loop_body
      %s25 = ssub.s32 %s20, 1
      %s26 = ssub.s32 %s20, 2
      %s27 = sadd.s32 %s20, 1
      %s28 = ssub.s32 %s20, %s27
      %p29 = scmp.eq.s32.totalorder %s28, 0
      %s31 = sadd.s32 %s30, 1
      %s32 = scalar_select %p29, %s30, %s31
      %p35 = pneg %p29
      %p36 = scmp.eq.s32.totalorder %s20, 1
      %p37 = por %p35, %p36
      %p38 = scmp.ne.s32.totalorder %s30, %s33
      %p39 = scmp.eq.s32.totalorder %s20, 0
      %p40 = por %p38, %p39
      %p41 = scmp.ne.s32.totalorder %s30, %s33
      %p42 = scmp.eq.s32.totalorder %s25, 1
      %p43 = por %p41, %p42
      %p44 = scmp.ne.s32.totalorder %s33, %s34
      %p45 = scmp.eq.s32.totalorder %s25, 0
      %p46 = por %p44, %p45
      %p47 = scmp.ne.s32.totalorder %s33, %s34
      %p48 = scmp.eq.s32.totalorder %s26, 1
      %p49 = por %p47, %p48
      %p51 = scmp.ne.s32.totalorder %s34, %s50
      %p52 = scmp.eq.s32.totalorder %s26, 0
      %p53 = por %p51, %p52
      %s55 = sadd.s32 %s54, 1
      %p58 = scmp.eq.s32.totalorder %s20, 1
      %p59 = scmp.ne.s32.totalorder %s54, %s56
      %p60 = scmp.eq.s32.totalorder %s20, 0
      %p61 = por %p59, %p60
      %p62 = scmp.ne.s32.totalorder %s54, %s56
      %p63 = scmp.eq.s32.totalorder %s25, 1
      %p64 = por %p62, %p63
      %p65 = scmp.ne.s32.totalorder %s56, %s57
      %p66 = scmp.eq.s32.totalorder %s25, 0
      %p67 = por %p65, %p66
      %p68 = scmp.ne.s32.totalorder %s56, %s57
      %p69 = scmp.eq.s32.totalorder %s26, 1
      %p70 = por %p68, %p69
      %p72 = scmp.ne.s32.totalorder %s57, %s71
      %p73 = scmp.eq.s32.totalorder %s26, 0
      %p74 = por %p72, %p73
      %s76 = sadd.s32 %s75, 1
      %p79 = scmp.eq.s32.totalorder %s20, 1
      %p80 = scmp.ne.s32.totalorder %s75, %s77
      %p81 = scmp.eq.s32.totalorder %s20, 0
      %p82 = por %p80, %p81
      %p83 = scmp.ne.s32.totalorder %s75, %s77
      %p84 = scmp.eq.s32.totalorder %s25, 1
      %p85 = por %p83, %p84
      %p86 = scmp.ne.s32.totalorder %s77, %s78
      %p87 = scmp.eq.s32.totalorder %s25, 0
      %p88 = por %p86, %p87
      %p89 = scmp.ne.s32.totalorder %s77, %s78
      %p90 = scmp.eq.s32.totalorder %s26, 1
      %p91 = por %p89, %p90
      %p93 = scmp.ne.s32.totalorder %s78, %s92
      %p94 = scmp.eq.s32.totalorder %s26, 0
      %p95 = por %p93, %p94
      %s97 = sadd.s32 %s96, 1
      %p100 = scmp.eq.s32.totalorder %s20, 1
      %p101 = scmp.ne.s32.totalorder %s96, %s98
      %p102 = scmp.eq.s32.totalorder %s20, 0
      %p103 = por %p101, %p102
      %p104 = scmp.ne.s32.totalorder %s96, %s98
      %p105 = scmp.eq.s32.totalorder %s25, 1
      %p106 = por %p104, %p105
      %p107 = scmp.ne.s32.totalorder %s98, %s99
      %p108 = scmp.eq.s32.totalorder %s25, 0
      %p109 = por %p107, %p108
      %p110 = scmp.ne.s32.totalorder %s98, %s99
      %p111 = scmp.eq.s32.totalorder %s26, 1
      %p112 = por %p110, %p111
      %p114 = scmp.ne.s32.totalorder %s99, %s113
      %p115 = scmp.eq.s32.totalorder %s26, 0
      %p116 = por %p114, %p115
      %s118 = sadd.s32 %s117, 1
      %p121 = scmp.eq.s32.totalorder %s20, 1
      %p122 = scmp.ne.s32.totalorder %s117, %s119
      %p123 = scmp.eq.s32.totalorder %s20, 0
      %p124 = por %p122, %p123
      %p125 = scmp.ne.s32.totalorder %s117, %s119
      %p126 = scmp.eq.s32.totalorder %s25, 1
      %p127 = por %p125, %p126
      %p128 = scmp.ne.s32.totalorder %s119, %s120
      %p129 = scmp.eq.s32.totalorder %s25, 0
      %p130 = por %p128, %p129
      %p131 = scmp.ne.s32.totalorder %s119, %s120
      %p132 = scmp.eq.s32.totalorder %s26, 1
      %p133 = por %p131, %p132
      %p135 = scmp.ne.s32.totalorder %s120, %s134
      %p136 = scmp.eq.s32.totalorder %s26, 0
      %p137 = por %p135, %p136
      %s139 = sadd.s32 %s138, 1
      %p142 = scmp.eq.s32.totalorder %s20, 1
      %p143 = scmp.ne.s32.totalorder %s138, %s140
      %p144 = scmp.eq.s32.totalorder %s20, 0
      %p145 = por %p143, %p144
      %p146 = scmp.ne.s32.totalorder %s138, %s140
      %p147 = scmp.eq.s32.totalorder %s25, 1
      %p148 = por %p146, %p147
      %p149 = scmp.ne.s32.totalorder %s140, %s141
      %p150 = scmp.eq.s32.totalorder %s25, 0
      %p151 = por %p149, %p150
      %p152 = scmp.ne.s32.totalorder %s140, %s141
      %p153 = scmp.eq.s32.totalorder %s26, 1
      %p154 = por %p152, %p153
      %p156 = scmp.ne.s32.totalorder %s141, %s155
      %p157 = scmp.eq.s32.totalorder %s26, 0
      %p158 = por %p156, %p157
      %s160 = sadd.s32 %s159, 1
      %p163 = scmp.eq.s32.totalorder %s20, 1
      %p164 = scmp.ne.s32.totalorder %s159, %s161
      %p165 = scmp.eq.s32.totalorder %s20, 0
      %p166 = por %p164, %p165
      %p167 = scmp.ne.s32.totalorder %s159, %s161
      %p168 = scmp.eq.s32.totalorder %s25, 1
      %p169 = por %p167, %p168
      %p170 = scmp.ne.s32.totalorder %s161, %s162
      %p171 = scmp.eq.s32.totalorder %s25, 0
      %p172 = por %p170, %p171
      %p173 = scmp.ne.s32.totalorder %s161, %s162
      %p174 = scmp.eq.s32.totalorder %s26, 1
      %p175 = por %p173, %p174
      %p177 = scmp.ne.s32.totalorder %s162, %s176
      %p178 = scmp.eq.s32.totalorder %s26, 0
      %p179 = por %p177, %p178
      %s181 = sadd.s32 %s180, 1
      %p184 = scmp.eq.s32.totalorder %s20, 1
      %p185 = scmp.ne.s32.totalorder %s180, %s182
      %p186 = scmp.eq.s32.totalorder %s20, 0
      %p187 = por %p185, %p186
      %p188 = scmp.ne.s32.totalorder %s180, %s182
      %p189 = scmp.eq.s32.totalorder %s25, 1
      %p190 = por %p188, %p189
      %p191 = scmp.ne.s32.totalorder %s182, %s183
      %p192 = scmp.eq.s32.totalorder %s25, 0
      %p193 = por %p191, %p192
      %p194 = scmp.ne.s32.totalorder %s182, %s183
      %p195 = scmp.eq.s32.totalorder %s26, 1
      %p196 = por %p194, %p195
      %p198 = scmp.ne.s32.totalorder %s183, %s197
      %p199 = scmp.eq.s32.totalorder %s26, 0
      %p200 = por %p198, %p199
      %s202 = sadd.s32 %s201, 1
      %p205 = scmp.eq.s32.totalorder %s20, 1
      %p206 = scmp.ne.s32.totalorder %s201, %s203
      %p207 = scmp.eq.s32.totalorder %s20, 0
      %p208 = por %p206, %p207
      %p209 = scmp.ne.s32.totalorder %s201, %s203
      %p210 = scmp.eq.s32.totalorder %s25, 1
      %p211 = por %p209, %p210
      %p212 = scmp.ne.s32.totalorder %s203, %s204
      %p213 = scmp.eq.s32.totalorder %s25, 0
      %p214 = por %p212, %p213
      %p215 = scmp.ne.s32.totalorder %s203, %s204
      %p216 = scmp.eq.s32.totalorder %s26, 1
      %p217 = por %p215, %p216
      %p219 = scmp.ne.s32.totalorder %s204, %s218
      %p220 = scmp.eq.s32.totalorder %s26, 0
      %p221 = por %p219, %p220
      %s222 = ssub.s32 %s20, %s27
      %p223 = scmp.eq.s32.totalorder %s222, 0
      %s225 = sadd.s32 %s224, 1
      %s226 = scalar_select %p223, %s224, %s225
      %p229 = pneg %p223
      %p230 = scmp.eq.s32.totalorder %s20, 1
      %p231 = por %p229, %p230
      %p232 = scmp.ne.s32.totalorder %s224, %s227
      %p233 = scmp.eq.s32.totalorder %s20, 0
      %p234 = por %p232, %p233
      %p235 = scmp.ne.s32.totalorder %s224, %s227
      %p236 = scmp.eq.s32.totalorder %s25, 1
      %p237 = por %p235, %p236
      %p238 = scmp.ne.s32.totalorder %s227, %s228
      %p239 = scmp.eq.s32.totalorder %s25, 0
      %p240 = por %p238, %p239
      %p241 = scmp.ne.s32.totalorder %s227, %s228
      %p242 = scmp.eq.s32.totalorder %s26, 1
      %p243 = por %p241, %p242
      %p245 = scmp.ne.s32.totalorder %s228, %s244
      %p246 = scmp.eq.s32.totalorder %s26, 0
      %p247 = por %p245, %p246
      %p248 = scmp.le.s32.totalorder 1, %s20
      %p249 = scmp.lt.s32.totalorder %s20, 3
      %p250 = pnand %p248, %p249
      %p251 = pneg %p250
      // Predicated region
      $region9: #{tpu_custom_call.1} parent=5 // pred_check
        _
      $region10: #{tpu_custom_call.1} parent=5 // pred_check_branch
        %253 = sbr.rel (%p250) target = $region12
      $region11: #{tpu_custom_call.1} parent=5 // pred_region
        %s254 = ssub.s32 %s20, 1
        // Predicated region
        $region13: #{tpu_custom_call.1} parent=11 // pred_check
          %p255 = pneg %p67
        $region14: #{tpu_custom_call.1} parent=11 // pred_check_branch
          %257 = sbr.rel (%p255) target = $region16
        $region15: #{tpu_custom_call.1} parent=11 // pred_region
          %s259 = ssub.s32 256, 256
          %260 = vsyncadd [#allocation4], %s259
          %s261 = sshll.u32 [#allocation3], 4
          %s262 = int_to_ptr.vmem [resolvable:$true] %s261
          %267 = dma.hbm_to_vmem [thread:$0]  %s1, 256, %s262, [#allocation4], 128, 128, 8
        $region16: #{tpu_custom_call.1} parent=11 // pred_fallthru
          _
        // Predicated region
        $region17: #{tpu_custom_call.1} parent=11 // pred_check
          %p268 = pneg %p88
        $region18: #{tpu_custom_call.1} parent=11 // pred_check_branch
          %270 = sbr.rel (%p268) target = $region20
        $region19: #{tpu_custom_call.1} parent=11 // pred_region
          _
        $region20: #{tpu_custom_call.1} parent=11 // pred_fallthru
          _
        // Predicated region
        $region21: #{tpu_custom_call.1} parent=11 // pred_check
          %p271 = pneg %p109
        $region22: #{tpu_custom_call.1} parent=11 // pred_check_branch
          %273 = sbr.rel (%p271) target = $region24
        $region23: #{tpu_custom_call.1} parent=11 // pred_region
          %s275 = ssub.s32 128, 128
          %276 = vsyncadd [#allocation7], %s275
          %s278 = sshll.u32 [#allocation6], 4
          %s279 = int_to_ptr.vmem [resolvable:$true] %s278
          %281 = dma.hbm_to_vmem [thread:$0]  %s3, 128, %s279, [#allocation7]
        $region24: #{tpu_custom_call.1} parent=11 // pred_fallthru
          _
        // Predicated region
        $region25: #{tpu_custom_call.1} parent=11 // pred_check
          %p282 = pneg %p130
        $region26: #{tpu_custom_call.1} parent=11 // pred_check_branch
          %284 = sbr.rel (%p282) target = $region28
        $region27: #{tpu_custom_call.1} parent=11 // pred_region
          _
        $region28: #{tpu_custom_call.1} parent=11 // pred_fallthru
          _
        // Predicated region
        $region29: #{tpu_custom_call.1} parent=11 // pred_check
          %p285 = pneg %p151
        $region30: #{tpu_custom_call.1} parent=11 // pred_check_branch
          %287 = sbr.rel (%p285) target = $region32
        $region31: #{tpu_custom_call.1} parent=11 // pred_region
          _
        $region32: #{tpu_custom_call.1} parent=11 // pred_fallthru
          _
        // Predicated region
        $region33: #{tpu_custom_call.1} parent=11 // pred_check
          %p288 = pneg %p172
        $region34: #{tpu_custom_call.1} parent=11 // pred_check_branch
          %290 = sbr.rel (%p288) target = $region36
        $region35: #{tpu_custom_call.1} parent=11 // pred_region
          _
        $region36: #{tpu_custom_call.1} parent=11 // pred_fallthru
          _
        // Predicated region
        $region37: #{tpu_custom_call.1} parent=11 // pred_check
          %p291 = pneg %p193
        $region38: #{tpu_custom_call.1} parent=11 // pred_check_branch
          %293 = sbr.rel (%p291) target = $region40
        $region39: #{tpu_custom_call.1} parent=11 // pred_region
          _
        $region40: #{tpu_custom_call.1} parent=11 // pred_fallthru
          _
        // Predicated region
        $region41: #{tpu_custom_call.1} parent=11 // pred_check
          %p294 = pneg %p214
        $region42: #{tpu_custom_call.1} parent=11 // pred_check_branch
          %296 = sbr.rel (%p294) target = $region44
        $region43: #{tpu_custom_call.1} parent=11 // pred_region
          _
        $region44: #{tpu_custom_call.1} parent=11 // pred_fallthru
          _
      $region12: #{tpu_custom_call.1} parent=5 // pred_fallthru
        _
      %p297 = scmp.lt.s32.totalorder %s20, 2
      // Predicated region
      $region45: #{tpu_custom_call.1} parent=5 // pred_check
        %p298 = pneg %p297
      $region46: #{tpu_custom_call.1} parent=5 // pred_check_branch
        %300 = sbr.rel (%p298) target = $region48
      $region47: #{tpu_custom_call.1} parent=5 // pred_region
        // Predicated region
        $region49: #{tpu_custom_call.1} parent=47 // pred_check
          %p301 = pneg %p40
        $region50: #{tpu_custom_call.1} parent=47 // pred_check_branch
          %303 = sbr.rel (%p301) target = $region52
        $region51: #{tpu_custom_call.1} parent=47 // pred_region
          %s304 = sand.u32 %s30, 1
          %s305 = sand.u32 %s30, 1
          %s306 = smul.addr %s305, 64
          %s307 = scalar_lea.vmem [#allocation2], %s306
          %s308 = smul.u32 2, %s20
          %s309 = smul.addr %s308, 8
          %s310 = scalar_lea.vmem %s0, %s309
          // Predicated region
          $region53: #{tpu_custom_call.1} parent=51 // pred_check
            _
          $region54: #{tpu_custom_call.1} parent=51 // pred_check_branch
            %312 = sbr.rel (0) target = $region56
          $region55: #{tpu_custom_call.1} parent=51 // pred_region
            // Predicated region
            $region57: #{tpu_custom_call.1} parent=55 // pred_check
              _
            $region58: #{tpu_custom_call.1} parent=55 // pred_check_branch
              %314 = sbr.rel (0) target = $region60
            $region59: #{tpu_custom_call.1} parent=55 // pred_region
              loop: start=0, step=1, limit=1
              $region61: #{tpu_custom_call.1} parent=59 // loop_pre_header
                _
              $region62: #{tpu_custom_call.1} parent=59 // loop_header
                %s316 = sphi 0, %s320
                %p317 = scmp.ge.s32.totalorder %s316, 1
                %s321 = sphi %s310, %s310
                %s322 = sphi %s307, %s307
              $region63: #{tpu_custom_call.1} parent=59 // loop_header_branch
                %319 = sbr.rel (%p317) target = $region67
              $region64: #{tpu_custom_call.1} parent=59 // loop_body
                %v323 = vld [vmem:[%s321] sm:$0xff]
                %324 = vst [vmem:[%s322] sm:$0xff] %v323
                %v325 = vld [vmem:[%s321 + $0x8] sm:$0xff]
                %326 = vst [vmem:[%s322 + $0x8] sm:$0xff] %v325
                %v327 = vld [vmem:[%s321 + $0x20] sm:$0xff]
                %328 = vst [vmem:[%s322 + $0x10] sm:$0xff] %v327
                %v329 = vld [vmem:[%s321 + $0x28] sm:$0xff]
                %330 = vst [vmem:[%s322 + $0x18] sm:$0xff] %v329
                %v331 = vld [vmem:[%s321 + $0x40] sm:$0xff]
                %332 = vst [vmem:[%s322 + $0x20] sm:$0xff] %v331
                %v333 = vld [vmem:[%s321 + $0x48] sm:$0xff]
                %334 = vst [vmem:[%s322 + $0x28] sm:$0xff] %v333
                %v335 = vld [vmem:[%s321 + $0x60] sm:$0xff]
                %336 = vst [vmem:[%s322 + $0x30] sm:$0xff] %v335
                %v337 = vld [vmem:[%s321 + $0x68] sm:$0xff]
                %338 = vst [vmem:[%s322 + $0x38] sm:$0xff] %v337
              $region65: #{tpu_custom_call.1} parent=59 // loop_footer
                %s320 = sadd.s32 1, %s316
              $region66: #{tpu_custom_call.1} parent=59 // loop_footer_branch
                %315 = sbr.rel target = $region62
              $region67: #{tpu_custom_call.1} parent=59 // loop_exit
                _
            $region60: #{tpu_custom_call.1} parent=55 // pred_fallthru
              _
            // Predicated region
            $region68: #{tpu_custom_call.1} parent=55 // pred_check
              _
            $region69: #{tpu_custom_call.1} parent=55 // pred_check_branch
              %340 = sbr.rel target = $region71
            $region70: #{tpu_custom_call.1} parent=55 // pred_region
              _
            $region71: #{tpu_custom_call.1} parent=55 // pred_fallthru
              _
          $region56: #{tpu_custom_call.1} parent=51 // pred_fallthru
            _
          %341 = vnop
        $region52: #{tpu_custom_call.1} parent=47 // pred_fallthru
          _
      $region48: #{tpu_custom_call.1} parent=5 // pred_fallthru
        _
      %p342 = scmp.le.s32.totalorder 1, %s20
      %p343 = scmp.lt.s32.totalorder %s20, 3
      %p344 = pnand %p342, %p343
      %p345 = pneg %p344
      // Predicated region
      $region72: #{tpu_custom_call.1} parent=5 // pred_check
        _
      $region73: #{tpu_custom_call.1} parent=5 // pred_check_branch
        %347 = sbr.rel (%p344) target = $region75
      $region74: #{tpu_custom_call.1} parent=5 // pred_region
        %s348 = ssub.s32 %s20, 1
        %s349 = sand.u32 %s33, 1
        %s350 = sand.u32 %s33, 1
        %s351 = smul.addr %s350, 64
        %s352 = scalar_lea.vmem [#allocation2], %s351
        // Predicated region
        $region76: #{tpu_custom_call.1} parent=74 // pred_check
          %p353 = pneg %p46
        $region77: #{tpu_custom_call.1} parent=74 // pred_check_branch
          %355 = sbr.rel (%p353) target = $region79
        $region78: #{tpu_custom_call.1} parent=74 // pred_region
          _
        $region79: #{tpu_custom_call.1} parent=74 // pred_fallthru
          _
        // Predicated region
        $region80: #{tpu_custom_call.1} parent=74 // pred_check
          %p356 = pneg %p67
        $region81: #{tpu_custom_call.1} parent=74 // pred_check_branch
          %358 = sbr.rel (%p356) target = $region83
        $region82: #{tpu_custom_call.1} parent=74 // pred_region
          %359 = dma.done [#allocation4], 256
        $region83: #{tpu_custom_call.1} parent=74 // pred_fallthru
          _
        // Predicated region
        $region84: #{tpu_custom_call.1} parent=74 // pred_check
          %p360 = pneg %p109
        $region85: #{tpu_custom_call.1} parent=74 // pred_check_branch
          %362 = sbr.rel (%p360) target = $region87
        $region86: #{tpu_custom_call.1} parent=74 // pred_region
          %363 = dma.done [#allocation7], 128
        $region87: #{tpu_custom_call.1} parent=74 // pred_fallthru
          _
        %s364 = sand.u32 %s33, 1
        %s365 = sand.u32 %s33, 1
        %s366 = smul.addr %s365, 64
        %s367 = scalar_lea.vmem [#allocation2], %s366
        %p368 = pneg %p46
        %p369 = pneg %p43
        %p370 = pneg %p67
        %p371 = pneg %p64
        %p372 = pneg %p88
        %p373 = pneg %p85
        %p374 = pneg %p109
        %p375 = pneg %p106
        %p376 = pneg %p130
        %p377 = pneg %p127
        %p378 = pneg %p151
        %p379 = pneg %p148
        %p380 = pneg %p172
        %p381 = pneg %p169
        %p382 = pneg %p193
        %p383 = pneg %p190
        %p384 = pneg %p214
        %p385 = pneg %p211
        %p386 = pneg %p240
        %p387 = pneg %p237
        %s388 = sand.u32 %s227, 1
        %s389 = scalar_lea.sflag [#allocation5], %s388
        %s390 = sand.u32 %s227, 1
        %s391 = smul.addr %s390, 64
        %s392 = scalar_lea.vmem [#allocation8], %s391
        %s393 = smul.u32 2, %s25
        %s394 = smul.u32 2, %s25
        %v395 = vld [vmem:[%s352] sm:$0xff]
        %v396 = vld [vmem:[%s352 + $0x8] sm:$0xff]
        %v397 = vld [vmem:[%s352 + $0x10] sm:$0xff]
        %v398 = vld [vmem:[%s352 + $0x18] sm:$0xff]
        %v399 = vld [vmem:[%s352 + $0x20] sm:$0xff]
        %v400 = vld [vmem:[%s352 + $0x28] sm:$0xff]
        %v401 = vld [vmem:[%s352 + $0x30] sm:$0xff]
        %v402 = vld [vmem:[%s352 + $0x38] sm:$0xff]
        %v403 = vld [vmem:[#allocation3] sm:$0xff]
        %v404 = vld [vmem:[#allocation3 + $0x8] sm:$0xff]
        %v405 = vld [vmem:[%s2] sm:$0xff]
        %v406 = vld [vmem:[%s2 + $0x8] sm:$0xff]
        %408 = vset.pattern.permute.xlu0 0
        %409 = vperm.xlu0 %408, %v405
        %v410 = vpop.permute.xlu0 %409
        %413 = vset.pattern.permute.xlu0 0
        %414 = vperm.xlu0 %413, %v406
        %v415 = vpop.permute.xlu0 %414
        %vm417 = vcmask 261120
        %v419 = vsel %vm417, %v403, 0
        %v422 = vsel %vm417, %v404, 0
        %424 = vmatprep.subr.mxu0 0.0
        %425 = vmatpush1.msra.mxu0 0.0
        %426 = vmatprep.subr.mxu0 0.0
        %427 = vmatpush1.msra.mxu0 0.0
        %428 = vmatprep.subr.mxu0 0.0
        %429 = vmatpush1.msra.mxu0 0.0
        %430 = vmatprep.subr.mxu0 0.0
        %431 = vmatpush1.msra.mxu0 0.0
        %432 = vmatprep.subr.mxu0 0.0
        %433 = vmatpush1.msra.mxu0 0.0
        %434 = vmatprep.subr.mxu0 0.0
        %435 = vmatpush1.msra.mxu0 0.0
        %436 = vmatprep.subr.mxu0 0.0
        %437 = vmatpush1.msra.mxu0 0.0
        %438 = vmatprep.subr.mxu0 0.0
        %439 = vmatpush1.msra.mxu0 0.0
        %440 = vmatprep.subr.mxu0 0.0
        %441 = vmatpush1.msra.mxu0 0.0
        %442 = vmatprep.subr.mxu0 0.0
        %443 = vmatpush1.msra.mxu0 0.0
        %444 = vmatprep.subr.mxu0 0.0
        %445 = vmatpush1.msra.mxu0 0.0
        %446 = vmatprep.subr.mxu0 0.0
        %447 = vmatpush1.msra.mxu0 0.0
        %448 = vmatprep.subr.mxu0 %v402
        %449 = vmatpush1.msra.mxu0 %v401
        %450 = vmatprep.subr.mxu0 %v400
        %451 = vmatpush1.msra.mxu0 %v399
        %452 = vmatprep.subr.mxu0 %v398
        %453 = vmatpush1.msra.mxu0 %v397
        %454 = vmatprep.subr.mxu0 %v396
        %455 = vmatpush1.msra.mxu0 %v395
        %456 = vmatprep.subr.mxu0 0.0
        %457 = vmatpush2.msra.mxu0 0.0
        %458 = vmatprep.subr.mxu0 0.0
        %459 = vmatpush2.msra.mxu0 0.0
        %460 = vmatprep.subr.mxu0 0.0
        %461 = vmatpush2.msra.mxu0 0.0
        %462 = vmatprep.subr.mxu0 0.0
        %463 = vmatpush2.msra.mxu0 0.0
        %464 = vmatprep.subr.mxu0 0.0
        %465 = vmatpush2.msra.mxu0 0.0
        %466 = vmatprep.subr.mxu0 0.0
        %467 = vmatpush2.msra.mxu0 0.0
        %468 = vmatprep.subr.mxu0 0.0
        %469 = vmatpush2.msra.mxu0 0.0
        %470 = vmatprep.subr.mxu0 0.0
        %471 = vmatpush2.msra.mxu0 0.0
        %472 = vmatprep.subr.mxu0 0.0
        %473 = vmatpush2.msra.mxu0 0.0
        %474 = vmatprep.subr.mxu0 0.0
        %475 = vmatpush2.msra.mxu0 0.0
        %476 = vmatprep.subr.mxu0 0.0
        %477 = vmatpush2.msra.mxu0 0.0
        %478 = vmatprep.subr.mxu0 0.0
        %479 = vmatpush2.msra.mxu0 0.0
        %480 = vmatprep.subr.mxu0 0.0
        %481 = vmatpush2.msra.mxu0 0.0
        %482 = vmatprep.subr.mxu0 0.0
        %483 = vmatpush2.msra.mxu0 0.0
        %484 = vmatprep.subr.mxu0 0.0
        %485 = vmatpush2.msra.mxu0 0.0
        %486 = vmatprep.subr.mxu0 0.0
        %487 = vmatpush2.msra.mxu0 0.0
        %488 = vmatprep.mubr.f32.mxu0 0.0
        %489 = vmatmul.mubr.f32.gmra.mxu0 %v419
        %v490 = vpop.f32.mrf.mxu0
        %v491 = vadd.f32 %v410, %v490
        %v492 = vpop.f32.mrf.mxu0
        %v493 = vadd.f32 %v410, %v492
        %494 = vmatprep.mubr.f32.mxu0 0.0
        %495 = vmatmul.mubr.f32.gmra.mxu0 %v422
        %v496 = vpop.f32.mrf.mxu0
        %v497 = vadd.f32 %v415, %v496
        %v498 = vpop.f32.mrf.mxu0
        %v499 = vadd.f32 %v415, %v498
        %500 = vdwg.mxu0
        %v501 = vmax.f32 %v491, 0.0
        %v502 = vmax.f32 %v493, 0.0
        %v503 = vmax.f32 %v497, 0.0
        %v504 = vmax.f32 %v499, 0.0
        %v505 = vld [vmem:[#allocation6] sm:$0xff]
        %v506 = vld [vmem:[%s4] sm:$0xff]
        %508 = vset.pattern.permute.xlu0 0
        %509 = vperm.xlu0 %508, %v506
        %v510 = vpop.permute.xlu0 %509
        %vm512 = vcmask 130048
        %v514 = vsel %vm512, %v505, 0
        %516 = vmatprep.subr.mxu0 0.0
        %517 = vmatpush1.msra.mxu0 0.0
        %518 = vmatprep.subr.mxu0 0.0
        %519 = vmatpush1.msra.mxu0 0.0
        %520 = vmatprep.subr.mxu0 0.0
        %521 = vmatpush1.msra.mxu0 0.0
        %522 = vmatprep.subr.mxu0 0.0
        %523 = vmatpush1.msra.mxu0 0.0
        %524 = vmatprep.subr.mxu0 0.0
        %525 = vmatpush1.msra.mxu0 0.0
        %526 = vmatprep.subr.mxu0 0.0
        %527 = vmatpush1.msra.mxu0 0.0
        %528 = vmatprep.subr.mxu0 0.0
        %529 = vmatpush1.msra.mxu0 0.0
        %530 = vmatprep.subr.mxu0 0.0
        %531 = vmatpush1.msra.mxu0 0.0
        %532 = vmatprep.subr.mxu0 0.0
        %533 = vmatpush1.msra.mxu0 0.0
        %534 = vmatprep.subr.mxu0 0.0
        %535 = vmatpush1.msra.mxu0 0.0
        %536 = vmatprep.subr.mxu0 0.0
        %537 = vmatpush1.msra.mxu0 0.0
        %538 = vmatprep.subr.mxu0 0.0
        %539 = vmatpush1.msra.mxu0 0.0
        %540 = vmatprep.subr.mxu0 0.0
        %541 = vmatpush1.msra.mxu0 0.0
        %542 = vmatprep.subr.mxu0 0.0
        %543 = vmatpush1.msra.mxu0 0.0
        %544 = vmatprep.subr.mxu0 %v504
        %545 = vmatpush1.msra.mxu0 %v503
        %546 = vmatprep.subr.mxu0 %v502
        %547 = vmatpush1.msra.mxu0 %v501
        %548 = vmatprep.subr.mxu0 0.0
        %549 = vmatpush2.msra.mxu0 0.0
        %550 = vmatprep.subr.mxu0 0.0
        %551 = vmatpush2.msra.mxu0 0.0
        %552 = vmatprep.subr.mxu0 0.0
        %553 = vmatpush2.msra.mxu0 0.0
        %554 = vmatprep.subr.mxu0 0.0
        %555 = vmatpush2.msra.mxu0 0.0
        %556 = vmatprep.subr.mxu0 0.0
        %557 = vmatpush2.msra.mxu0 0.0
        %558 = vmatprep.subr.mxu0 0.0
        %559 = vmatpush2.msra.mxu0 0.0
        %560 = vmatprep.subr.mxu0 0.0
        %561 = vmatpush2.msra.mxu0 0.0
        %562 = vmatprep.subr.mxu0 0.0
        %563 = vmatpush2.msra.mxu0 0.0
        %564 = vmatprep.subr.mxu0 0.0
        %565 = vmatpush2.msra.mxu0 0.0
        %566 = vmatprep.subr.mxu0 0.0
        %567 = vmatpush2.msra.mxu0 0.0
        %568 = vmatprep.subr.mxu0 0.0
        %569 = vmatpush2.msra.mxu0 0.0
        %570 = vmatprep.subr.mxu0 0.0
        %571 = vmatpush2.msra.mxu0 0.0
        %572 = vmatprep.subr.mxu0 0.0
        %573 = vmatpush2.msra.mxu0 0.0
        %574 = vmatprep.subr.mxu0 0.0
        %575 = vmatpush2.msra.mxu0 0.0
        %576 = vmatprep.subr.mxu0 0.0
        %577 = vmatpush2.msra.mxu0 0.0
        %578 = vmatprep.subr.mxu0 0.0
        %579 = vmatpush2.msra.mxu0 0.0
        %580 = vmatprep.mubr.f32.mxu0 0.0
        %581 = vmatmul.mubr.f32.gmra.mxu0 %v514
        %v582 = vpop.f32.mrf.mxu0
        %v583 = vadd.f32 %v510, %v582
        %v584 = vpop.f32.mrf.mxu0
        %v585 = vadd.f32 %v510, %v584
        %586 = vdwg.mxu0
        %v587 = vld [vmem:[%s5] sm:$0xff]
        %v588 = vld [vmem:[%s5 + $0x8] sm:$0xff]
        %v589 = vld [vmem:[%s6] sm:$0xff]
        %v590 = vld [vmem:[%s6 + $0x8] sm:$0xff]
        %592 = vset.pattern.permute.xlu0 0
        %593 = vperm.xlu0 %592, %v589
        %v594 = vpop.permute.xlu0 %593
        %597 = vset.pattern.permute.xlu0 0
        %598 = vperm.xlu0 %597, %v590
        %v599 = vpop.permute.xlu0 %598
        %vm601 = vcmask 64512
        %v603 = vsel %vm601, %v587, 0
        %v606 = vsel %vm601, %v588, 0
        %608 = vmatprep.subr.mxu0 0.0
        %609 = vmatpush1.msra.mxu0 0.0
        %610 = vmatprep.subr.mxu0 0.0
        %611 = vmatpush1.msra.mxu0 0.0
        %612 = vmatprep.subr.mxu0 0.0
        %613 = vmatpush1.msra.mxu0 0.0
        %614 = vmatprep.subr.mxu0 0.0
        %615 = vmatpush1.msra.mxu0 0.0
        %616 = vmatprep.subr.mxu0 0.0
        %617 = vmatpush1.msra.mxu0 0.0
        %618 = vmatprep.subr.mxu0 0.0
        %619 = vmatpush1.msra.mxu0 0.0
        %620 = vmatprep.subr.mxu0 0.0
        %621 = vmatpush1.msra.mxu0 0.0
        %622 = vmatprep.subr.mxu0 0.0
        %623 = vmatpush1.msra.mxu0 0.0
        %624 = vmatprep.subr.mxu0 0.0
        %625 = vmatpush1.msra.mxu0 0.0
        %626 = vmatprep.subr.mxu0 0.0
        %627 = vmatpush1.msra.mxu0 0.0
        %628 = vmatprep.subr.mxu0 0.0
        %629 = vmatpush1.msra.mxu0 0.0
        %630 = vmatprep.subr.mxu0 0.0
        %631 = vmatpush1.msra.mxu0 0.0
        %632 = vmatprep.subr.mxu0 0.0
        %633 = vmatpush1.msra.mxu0 0.0
        %634 = vmatprep.subr.mxu0 0.0
        %635 = vmatpush1.msra.mxu0 0.0
        %636 = vmatprep.subr.mxu0 0.0
        %637 = vmatpush1.msra.mxu0 0.0
        %638 = vmatprep.subr.mxu0 %v585
        %639 = vmatpush1.msra.mxu0 %v583
        %640 = vmatprep.subr.mxu0 0.0
        %641 = vmatpush2.msra.mxu0 0.0
        %642 = vmatprep.subr.mxu0 0.0
        %643 = vmatpush2.msra.mxu0 0.0
        %644 = vmatprep.subr.mxu0 0.0
        %645 = vmatpush2.msra.mxu0 0.0
        %646 = vmatprep.subr.mxu0 0.0
        %647 = vmatpush2.msra.mxu0 0.0
        %648 = vmatprep.subr.mxu0 0.0
        %649 = vmatpush2.msra.mxu0 0.0
        %650 = vmatprep.subr.mxu0 0.0
        %651 = vmatpush2.msra.mxu0 0.0
        %652 = vmatprep.subr.mxu0 0.0
        %653 = vmatpush2.msra.mxu0 0.0
        %654 = vmatprep.subr.mxu0 0.0
        %655 = vmatpush2.msra.mxu0 0.0
        %656 = vmatprep.subr.mxu0 0.0
        %657 = vmatpush2.msra.mxu0 0.0
        %658 = vmatprep.subr.mxu0 0.0
        %659 = vmatpush2.msra.mxu0 0.0
        %660 = vmatprep.subr.mxu0 0.0
        %661 = vmatpush2.msra.mxu0 0.0
        %662 = vmatprep.subr.mxu0 0.0
        %663 = vmatpush2.msra.mxu0 0.0
        %664 = vmatprep.subr.mxu0 0.0
        %665 = vmatpush2.msra.mxu0 0.0
        %666 = vmatprep.subr.mxu0 0.0
        %667 = vmatpush2.msra.mxu0 0.0
        %668 = vmatprep.subr.mxu0 0.0
        %669 = vmatpush2.msra.mxu0 0.0
        %670 = vmatprep.subr.mxu0 0.0
        %671 = vmatpush2.msra.mxu0 0.0
        %672 = vmatprep.mubr.f32.mxu0 0.0
        %673 = vmatmul.mubr.f32.gmra.mxu0 %v603
        %v674 = vpop.f32.mrf.mxu0
        %v675 = vadd.f32 %v594, %v674
        %v676 = vpop.f32.mrf.mxu0
        %v677 = vadd.f32 %v594, %v676
        %678 = vmatprep.mubr.f32.mxu0 0.0
        %679 = vmatmul.mubr.f32.gmra.mxu0 %v606
        %v680 = vpop.f32.mrf.mxu0
        %v681 = vadd.f32 %v599, %v680
        %v682 = vpop.f32.mrf.mxu0
        %v683 = vadd.f32 %v599, %v682
        %684 = vdwg.mxu0
        %v685 = vmax.f32 %v675, 0.0
        %v686 = vmax.f32 %v677, 0.0
        %v687 = vmax.f32 %v681, 0.0
        %v688 = vmax.f32 %v683, 0.0
        %v689 = vld [vmem:[%s7] sm:$0xff]
        %v690 = vld [vmem:[%s7 + $0x8] sm:$0xff]
        %v691 = vld [vmem:[%s7 + $0x10] sm:$0xff]
        %v692 = vld [vmem:[%s7 + $0x18] sm:$0xff]
        %v693 = vld [vmem:[%s8] sm:$0xff]
        %v694 = vld [vmem:[%s8 + $0x8] sm:$0xff]
        %v695 = vld [vmem:[%s8 + $0x10] sm:$0xff]
        %v696 = vld [vmem:[%s8 + $0x18] sm:$0xff]
        %698 = vset.pattern.permute.xlu0 0
        %699 = vperm.xlu0 %698, %v693
        %v700 = vpop.permute.xlu0 %699
        %703 = vset.pattern.permute.xlu0 0
        %704 = vperm.xlu0 %703, %v694
        %v705 = vpop.permute.xlu0 %704
        %708 = vset.pattern.permute.xlu0 0
        %709 = vperm.xlu0 %708, %v695
        %v710 = vpop.permute.xlu0 %709
        %713 = vset.pattern.permute.xlu0 0
        %714 = vperm.xlu0 %713, %v696
        %v715 = vpop.permute.xlu0 %714
        %v718 = vsel %vm512, %v689, 0
        %v721 = vsel %vm512, %v690, 0
        %v724 = vsel %vm512, %v691, 0
        %v727 = vsel %vm512, %v692, 0
        %729 = vmatprep.subr.mxu0 0.0
        %730 = vmatpush1.msra.mxu0 0.0
        %731 = vmatprep.subr.mxu0 0.0
        %732 = vmatpush1.msra.mxu0 0.0
        %733 = vmatprep.subr.mxu0 0.0
        %734 = vmatpush1.msra.mxu0 0.0
        %735 = vmatprep.subr.mxu0 0.0
        %736 = vmatpush1.msra.mxu0 0.0
        %737 = vmatprep.subr.mxu0 0.0
        %738 = vmatpush1.msra.mxu0 0.0
        %739 = vmatprep.subr.mxu0 0.0
        %740 = vmatpush1.msra.mxu0 0.0
        %741 = vmatprep.subr.mxu0 0.0
        %742 = vmatpush1.msra.mxu0 0.0
        %743 = vmatprep.subr.mxu0 0.0
        %744 = vmatpush1.msra.mxu0 0.0
        %745 = vmatprep.subr.mxu0 0.0
        %746 = vmatpush1.msra.mxu0 0.0
        %747 = vmatprep.subr.mxu0 0.0
        %748 = vmatpush1.msra.mxu0 0.0
        %749 = vmatprep.subr.mxu0 0.0
        %750 = vmatpush1.msra.mxu0 0.0
        %751 = vmatprep.subr.mxu0 0.0
        %752 = vmatpush1.msra.mxu0 0.0
        %753 = vmatprep.subr.mxu0 0.0
        %754 = vmatpush1.msra.mxu0 0.0
        %755 = vmatprep.subr.mxu0 0.0
        %756 = vmatpush1.msra.mxu0 0.0
        %757 = vmatprep.subr.mxu0 %v688
        %758 = vmatpush1.msra.mxu0 %v687
        %759 = vmatprep.subr.mxu0 %v686
        %760 = vmatpush1.msra.mxu0 %v685
        %761 = vmatprep.subr.mxu0 0.0
        %762 = vmatpush2.msra.mxu0 0.0
        %763 = vmatprep.subr.mxu0 0.0
        %764 = vmatpush2.msra.mxu0 0.0
        %765 = vmatprep.subr.mxu0 0.0
        %766 = vmatpush2.msra.mxu0 0.0
        %767 = vmatprep.subr.mxu0 0.0
        %768 = vmatpush2.msra.mxu0 0.0
        %769 = vmatprep.subr.mxu0 0.0
        %770 = vmatpush2.msra.mxu0 0.0
        %771 = vmatprep.subr.mxu0 0.0
        %772 = vmatpush2.msra.mxu0 0.0
        %773 = vmatprep.subr.mxu0 0.0
        %774 = vmatpush2.msra.mxu0 0.0
        %775 = vmatprep.subr.mxu0 0.0
        %776 = vmatpush2.msra.mxu0 0.0
        %777 = vmatprep.subr.mxu0 0.0
        %778 = vmatpush2.msra.mxu0 0.0
        %779 = vmatprep.subr.mxu0 0.0
        %780 = vmatpush2.msra.mxu0 0.0
        %781 = vmatprep.subr.mxu0 0.0
        %782 = vmatpush2.msra.mxu0 0.0
        %783 = vmatprep.subr.mxu0 0.0
        %784 = vmatpush2.msra.mxu0 0.0
        %785 = vmatprep.subr.mxu0 0.0
        %786 = vmatpush2.msra.mxu0 0.0
        %787 = vmatprep.subr.mxu0 0.0
        %788 = vmatpush2.msra.mxu0 0.0
        %789 = vmatprep.subr.mxu0 0.0
        %790 = vmatpush2.msra.mxu0 0.0
        %791 = vmatprep.subr.mxu0 0.0
        %792 = vmatpush2.msra.mxu0 0.0
        %793 = vmatprep.mubr.f32.mxu0 0.0
        %794 = vmatmul.mubr.f32.gmra.mxu0 %v718
        %v795 = vpop.f32.mrf.mxu0
        %v796 = vadd.f32 %v700, %v795
        %v797 = vpop.f32.mrf.mxu0
        %v798 = vadd.f32 %v700, %v797
        %799 = vmatprep.mubr.f32.mxu0 0.0
        %800 = vmatmul.mubr.f32.gmra.mxu0 %v721
        %v801 = vpop.f32.mrf.mxu0
        %v802 = vadd.f32 %v705, %v801
        %v803 = vpop.f32.mrf.mxu0
        %v804 = vadd.f32 %v705, %v803
        %805 = vmatprep.mubr.f32.mxu0 0.0
        %806 = vmatmul.mubr.f32.gmra.mxu0 %v724
        %v807 = vpop.f32.mrf.mxu0
        %v808 = vadd.f32 %v710, %v807
        %v809 = vpop.f32.mrf.mxu0
        %v810 = vadd.f32 %v710, %v809
        %811 = vmatprep.mubr.f32.mxu0 0.0
        %812 = vmatmul.mubr.f32.gmra.mxu0 %v727
        %v813 = vpop.f32.mrf.mxu0
        %v814 = vadd.f32 %v715, %v813
        %v815 = vpop.f32.mrf.mxu0
        %v816 = vadd.f32 %v715, %v815
        %817 = vdwg.mxu0
        %v818 = vadd.f32 %v796, %v395
        %v819 = vadd.f32 %v798, %v396
        %v820 = vadd.f32 %v802, %v397
        %v821 = vadd.f32 %v804, %v398
        %v822 = vadd.f32 %v808, %v399
        %v823 = vadd.f32 %v810, %v400
        %v824 = vadd.f32 %v814, %v401
        %v825 = vadd.f32 %v816, %v402
        %826 = vst [vmem:[%s392] sm:$0xff] %v818
        %827 = vst [vmem:[%s392 + $0x8] sm:$0xff] %v819
        %828 = vst [vmem:[%s392 + $0x10] sm:$0xff] %v820
        %829 = vst [vmem:[%s392 + $0x18] sm:$0xff] %v821
        %830 = vst [vmem:[%s392 + $0x20] sm:$0xff] %v822
        %831 = vst [vmem:[%s392 + $0x28] sm:$0xff] %v823
        %832 = vst [vmem:[%s392 + $0x30] sm:$0xff] %v824
        %833 = vst [vmem:[%s392 + $0x38] sm:$0xff] %v825
        %s834 = sand.u32 %s227, 1
        %s835 = scalar_lea.sflag [#allocation5], %s834
        %s836 = sand.u32 %s227, 1
        %s837 = smul.addr %s836, 64
        %s838 = scalar_lea.vmem [#allocation8], %s837
        // Predicated region
        $region88: #{tpu_custom_call.1} parent=74 // pred_check
          %p839 = pneg %p237
        $region89: #{tpu_custom_call.1} parent=74 // pred_check_branch
          %841 = sbr.rel (%p839) target = $region91
        $region90: #{tpu_custom_call.1} parent=74 // pred_region
          %s842 = smul.u32 2, %s25
          %s844 = ssub.s32 1024, 1024
          %845 = vsyncadd %s835, %s844
          %s846 = smul.addr %s842, 128
          %s847 = scalar_lea.hbm %s9, %s846
          %s848 = sshll.u32 %s838, 4
          %s849 = int_to_ptr.vmem [resolvable:$true] %s848
          %854 = dma.vmem_to_hbm [thread:$0]  %s849, 1024, %s847, %s835, 256, 512, 16
        $region91: #{tpu_custom_call.1} parent=74 // pred_fallthru
          _
      $region75: #{tpu_custom_call.1} parent=5 // pred_fallthru
        _
      %p855 = scmp.le.s32.totalorder 2, %s20
      // Predicated region
      $region92: #{tpu_custom_call.1} parent=5 // pred_check
        %p856 = pneg %p855
      $region93: #{tpu_custom_call.1} parent=5 // pred_check_branch
        %858 = sbr.rel (%p856) target = $region95
      $region94: #{tpu_custom_call.1} parent=5 // pred_region
        %s859 = ssub.s32 %s20, 2
        // Predicated region
        $region96: #{tpu_custom_call.1} parent=94 // pred_check
          %p860 = pneg %p243
        $region97: #{tpu_custom_call.1} parent=94 // pred_check_branch
          %862 = sbr.rel (%p860) target = $region99
        $region98: #{tpu_custom_call.1} parent=94 // pred_region
          %s863 = sand.u32 %s228, 1
          %s864 = scalar_lea.sflag [#allocation5], %s863
          %s865 = sand.u32 %s228, 1
          %s866 = smul.addr %s865, 64
          %s867 = scalar_lea.vmem [#allocation8], %s866
          %868 = dma.done %s864, 1024
        $region99: #{tpu_custom_call.1} parent=94 // pred_fallthru
          _
      $region95: #{tpu_custom_call.1} parent=5 // pred_fallthru
        _
    $region6: #{tpu_custom_call.1} parent=1 // loop_footer
      %s24 = sadd.s32 1, %s20
    $region7: #{tpu_custom_call.1} parent=1 // loop_footer_branch
      %19 = sbr.rel target = $region3
    $region8: #{tpu_custom_call.1} parent=1 // loop_exit
      _
    %869 = vsyncpa [#allocation4], 1
    %s870 = scalar_lea.sflag [#allocation4], 1
    %871 = vsyncpa %s870, 1
    %872 = vsyncpa [#allocation7], 1
    %873 = vsyncpa [#allocation5], 1
    %s874 = scalar_lea.sflag [#allocation5], 1
    %875 = vsyncpa %s874, 1

</llo_original>
